<compile_context>
chip_gen: v6e
topology: v6e:2x2x1
jax: 0.10.0
libtpu: 0.0.40
codegen_flags: <defaults>
</compile_context>

<pallas_src>
import functools

import jax
import jax.numpy as jnp
from jax.experimental import pallas as pl
from jax.experimental.pallas import tpu as pltpu


def _round_up(x, m):
    return (x + m - 1) // m * m


# 40 MiB: safe on v7x (64 MiB physical VMEM), plenty of headroom on v5e/v6e.
_VMEM_LIMIT = 40 * 1024 * 1024


# ----------------------------------------------------------------------------
# Kernel 1: fused matmul + bias (+ residual) + ReLU  (the 1x1 convs)
#
# Weight and bias blocks are VMEM-resident (index_map constant over the grid);
# only x / residual / out are streamed over the 1-D M grid.
# ----------------------------------------------------------------------------
def _mm_bias_relu_kernel(x_ref, w_ref, b_ref, o_ref):
    acc = jnp.dot(x_ref[...], w_ref[...], preferred_element_type=jnp.float32)
    o_ref[...] = jnp.maximum(acc + b_ref[...], 0.0).astype(o_ref.dtype)


def _mm_bias_res_relu_kernel(x_ref, w_ref, b_ref, res_ref, o_ref):
    acc = jnp.dot(x_ref[...], w_ref[...], preferred_element_type=jnp.float32)
    acc = acc + b_ref[...] + res_ref[...].astype(jnp.float32)
    o_ref[...] = jnp.maximum(acc, 0.0).astype(o_ref.dtype)


def fused_matmul_bias_relu(x, w, bias, residual=None, out_dtype=jnp.bfloat16):
    """relu(x @ w + bias [+ residual]) with a single bf16 MXU matmul per M tile.

    x: (M, K); w: (K, N); bias: (N,) f32; residual: (M, N) or None.
    Every Bottleneck 1x1 weight is <= ~2 MiB bf16, so the full (Kp, Np) weight
    stays resident in VMEM and the grid is 1-D over M only.
    """
    M, K = x.shape
    Kw, N = w.shape
    assert K == Kw and bias.shape == (N,)

    Kp = _round_up(K, 128)
    Np = _round_up(N, 128)
    tm = min(512, _round_up(M, 16))          # bf16: 2 rows per sublane
    Mp = _round_up(M, tm)

    if (Mp, Kp) != (M, K):
        x = jnp.pad(x, ((0, Mp - M), (0, Kp - K)))
    if (Kp, Np) != (K, N):
        w = jnp.pad(w, ((0, Kp - K), (0, Np - N)))
    b2 = jnp.pad(bias.astype(jnp.float32).reshape(1, N), ((0, 0), (0, Np - N)))

    grid = (Mp // tm,)
    in_specs = [
        pl.BlockSpec((tm, Kp), lambda i: (i, 0)),     # streamed over M
        pl.BlockSpec((Kp, Np), lambda i: (0, 0)),     # resident full weight
        pl.BlockSpec((1, Np), lambda i: (0, 0)),      # resident bias
    ]
    args = [x.astype(jnp.bfloat16), w.astype(jnp.bfloat16), b2]

    if residual is None:
        kernel = _mm_bias_relu_kernel
    else:
        if residual.shape != (Mp, Np):
            residual = jnp.pad(residual,
                               ((0, Mp - residual.shape[0]),
                                (0, Np - residual.shape[1])))
        in_specs.append(pl.BlockSpec((tm, Np), lambda i: (i, 0)))
        args.append(residual.astype(jnp.bfloat16))
        kernel = _mm_bias_res_relu_kernel

    out = pl.pallas_call(
        kernel,
        out_shape=jax.ShapeDtypeStruct((Mp, Np), out_dtype),
        grid=grid,
        in_specs=in_specs,
        out_specs=pl.BlockSpec((tm, Np), lambda i: (i, 0)),
        compiler_params=pltpu.CompilerParams(
            dimension_semantics=("parallel",),
            vmem_limit_bytes=_VMEM_LIMIT,
        ),
    )(*args)
    return out[:M, :N]


# ----------------------------------------------------------------------------
# Kernel 2: fused 3x3 conv (stride=1, pad=1) + bias + ReLU, no im2col.
#
# The padded image is flattened row-major to (Pi, C) and kept in VMEM; the
# 3x3 conv is 9 accumulated matmuls of row-shifted bf16 views against per-tap
# (C, Cout) weight slabs.  Output rows are produced in "padded-width" layout
# (W+2 columns per row; the 2 extra columns are garbage and sliced off in the
# wrapper).
# ----------------------------------------------------------------------------
def _make_conv3x3_kernel(H, W):
    Wp = W + 2
    Mo = H * Wp

    def kernel(x_ref, w_ref, b_ref, o_ref):
        acc = jnp.zeros(o_ref.shape, jnp.float32)
        for kh in range(3):
            for kw in range(3):
                off = kh * Wp + kw                       # static tap offset
                patch = x_ref[off:off + Mo, :]           # bf16, straight to MXU
                acc = acc + jnp.dot(patch, w_ref[kh * 3 + kw],
                                    preferred_element_type=jnp.float32)
        o_ref[...] = jnp.maximum(acc + b_ref[...], 0.0).astype(o_ref.dtype)

    return kernel


def fused_conv3x3_bias_relu(x_nhwc, w9, bias, out_dtype=jnp.bfloat16):
    """3x3 conv, stride 1, padding 1, fused with bias + ReLU.

    x_nhwc: (N, H, W, C) with C a multiple of 128; w9: (9, C, Cout) with the
    BN scale already folded in (Cout a multiple of 128); bias: (Cout,) f32.
    Returns (N, H, W, Cout).
    """
    Nb, H, W, C = x_nhwc.shape
    _, Cw, Cout = w9.shape
    assert Cw == C and bias.shape == (Cout,)
    Wp = W + 2
    Mo = H * Wp
    Pi0 = (H + 2) * Wp
    Pi = _round_up(Pi0 + 2, 8)      # +2 keeps the last garbage-tap read in-bounds

    xp = jnp.pad(x_nhwc, ((0, 0), (1, 1), (1, 1), (0, 0)))      # spatial pad
    xf = xp.reshape(Nb, Pi0, C)
    xf = jnp.pad(xf, ((0, 0), (0, Pi - Pi0), (0, 0))).astype(jnp.bfloat16)

    # tn capped at 256 so the (Mo, tn) f32 accumulator stays small on v7x.
    # TODO(synk): raise tn to 512 (v6e) once the H axis is halo-tiled.
    tn = 256 if Cout % 256 == 0 else 128
    b2 = bias.astype(jnp.float32).reshape(1, Cout)

    out = pl.pallas_call(
        _make_conv3x3_kernel(H, W),
        out_shape=jax.ShapeDtypeStruct((Nb, Mo, Cout), out_dtype),
        grid=(Nb, Cout // tn),
        in_specs=[
            pl.BlockSpec((None, Pi, C), lambda n, j: (n, 0, 0)),
            pl.BlockSpec((9, C, tn), lambda n, j: (0, 0, j)),
            pl.BlockSpec((1, tn), lambda n, j: (0, j)),
        ],
        out_specs=pl.BlockSpec((None, Mo, tn), lambda n, j: (n, 0, j)),
        compiler_params=pltpu.CompilerParams(
            dimension_semantics=("parallel", "parallel"),
            vmem_limit_bytes=_VMEM_LIMIT,
        ),
    )(xf, w9.astype(jnp.bfloat16), b2)

    # Drop the 2 garbage columns of the padded-width output layout.
    # TODO(synk): tile the output-row (H) axis with a 1-row halo (v7x 64 MiB
    # VMEM) and store dense W-wide rows to remove this slice copy.
    return out.reshape(Nb, H, Wp, Cout)[:, :, :W, :]


# ----------------------------------------------------------------------------
# BN folding (eval-mode running stats)
# ----------------------------------------------------------------------------
def _fold_bn(gamma, beta, running_mean, running_var, eps=1e-5):
    scale = gamma / jnp.sqrt(running_var + eps)
    bias = beta - running_mean * scale
    return scale, bias


# ----------------------------------------------------------------------------
# Bottleneck forward (downsample=None, stride=1)
#
# Note: activations, weights and the residual are bf16 between stages (f32
# accumulation inside the kernels), so results deviate slightly from a pure
# f32 reference (covered by the 5e-2 tolerance below).
# ----------------------------------------------------------------------------
@functools.partial(jax.jit, static_argnames=("stride",))
def bottleneck_forward(x_nchw, params, stride=1):
    if stride != 1:
        # TODO(synk): stride>1 + downsample branch (strided conv2 / 1x1
        # projection of the residual) is not implemented.
        raise NotImplementedError("Only stride=1 / downsample=None supported.")

    # NCHW -> NHWC done in bf16 (halves the transpose traffic).
    x = jnp.transpose(x_nchw.astype(jnp.bfloat16), (0, 2, 3, 1))
    Nb, H, W, Cin = x.shape
    planes = params["conv1_w"].shape[0]
    cout = params["conv3_w"].shape[0]                # planes * 4
    assert Cin == cout, "downsample=None requires in_planes == planes*4"

    Cin_p = _round_up(Cin, 128)
    P_p = _round_up(planes, 128)
    Co_p = _round_up(cout, 128)                      # == Cin_p

    # ---- fold BN into weights (scale) + bias, pad channels to 128 --------
    s1, b1 = _fold_bn(params["bn1_g"], params["bn1_b"],
                      params["bn1_m"], params["bn1_v"])
    w1 = params["conv1_w"][:, :, 0, 0]               # (planes, Cin)
    w1m = jnp.pad((w1 * s1[:, None]).T, ((0, Cin_p - Cin), (0, P_p - planes)))
    b1p = jnp.pad(b1, (0, P_p - planes))

    s2, b2 = _fold_bn(params["bn2_g"], params["bn2_b"],
                      params["bn2_m"], params["bn2_v"])
    w2 = params["conv2_w"] * s2[:, None, None, None]  # (out, in, 3, 3)
    w2m = jnp.transpose(w2, (2, 3, 1, 0)).reshape(9, planes, planes)
    w2m = jnp.pad(w2m, ((0, 0), (0, P_p - planes), (0, P_p - planes)))
    b2p = jnp.pad(b2, (0, P_p - planes))

    s3, b3 = _fold_bn(params["bn3_g"], params["bn3_b"],
                      params["bn3_m"], params["bn3_v"])
    w3 = params["conv3_w"][:, :, 0, 0]               # (cout, planes)
    w3m = jnp.pad((w3 * s3[:, None]).T, ((0, P_p - planes), (0, Co_p - cout)))
    b3p = jnp.pad(b3, (0, Co_p - cout))

    # ---- channel-pad the input once (also serves as the residual) --------
    x_p = jnp.pad(x, ((0, 0), (0, 0), (0, 0), (0, Cin_p - Cin)))
    M = Nb * H * W
    x2d = x_p.reshape(M, Cin_p)                      # bf16

    # ---- conv1 (1x1) + bn1 + relu ----------------------------------------
    out1 = fused_matmul_bias_relu(x2d, w1m, b1p)     # (M, P_p) bf16
    out1 = out1.reshape(Nb, H, W, P_p)

    # ---- conv2 (3x3, pad=1) + bn2 + relu  (fused 9-tap kernel) -----------
    out2 = fused_conv3x3_bias_relu(out1, w2m, b2p)   # (Nb, H, W, P_p) bf16
    out2 = out2.reshape(M, P_p)

    # ---- conv3 (1x1) + bn3 + residual add + relu -------------------------
    out3 = fused_matmul_bias_relu(out2, w3m, b3p, residual=x2d,
                                  out_dtype=jnp.bfloat16)      # (M, Co_p)
    out3 = out3.reshape(Nb, H, W, Co_p)[..., :cout]
    # bf16 NHWC -> NCHW transpose, cast back to f32 fused into it.
    return jnp.transpose(out3, (0, 3, 1, 2)).astype(jnp.float32)


# ----------------------------------------------------------------------------
# Deterministic parameters + pure-JAX f32 reference
# ----------------------------------------------------------------------------
def make_params(key, in_planes, planes):
    ks = jax.random.split(key, 12)
    expansion = 4
    return {
        "conv1_w": jax.random.normal(ks[0], (planes, in_planes, 1, 1),
                                     jnp.float32) * 0.1,
        "conv2_w": jax.random.normal(ks[1], (planes, planes, 3, 3),
                                     jnp.float32) * 0.1,
        "conv3_w": jax.random.normal(ks[2], (planes * expansion, planes, 1, 1),
                                     jnp.float32) * 0.1,
        "bn1_g": jax.random.normal(ks[3], (planes,), jnp.float32) * 0.1 + 1.0,
        "bn1_b": jax.random.normal(ks[4], (planes,), jnp.float32) * 0.1,
        "bn1_m": jax.random.normal(ks[5], (planes,), jnp.float32) * 0.1,
        "bn1_v": jnp.abs(jax.random.normal(ks[6], (planes,), jnp.float32)) + 0.5,
        "bn2_g": jax.random.normal(ks[7], (planes,), jnp.float32) * 0.1 + 1.0,
        "bn2_b": jax.random.normal(ks[8], (planes,), jnp.float32) * 0.1,
        "bn2_m": jnp.zeros((planes,), jnp.float32),
        "bn2_v": jnp.ones((planes,), jnp.float32),
        "bn3_g": jax.random.normal(ks[9], (planes * expansion,),
                                   jnp.float32) * 0.1 + 1.0,
        "bn3_b": jax.random.normal(ks[10], (planes * expansion,),
                                   jnp.float32) * 0.1,
        "bn3_m": jnp.zeros((planes * expansion,), jnp.float32),
        "bn3_v": jnp.ones((planes * expansion,), jnp.float32),
    }


def reference_forward(x_nchw, params):
    def bn(x, g, b, m, v, eps=1e-5):
        g = g[None, :, None, None]
        b = b[None, :, None, None]
        m = m[None, :, None, None]
        v = v[None, :, None, None]
        return (x - m) / jnp.sqrt(v + eps) * g + b

    dn = ("NCHW", "OIHW", "NCHW")
    out = jax.lax.conv_general_dilated(x_nchw, params["conv1_w"], (1, 1),
                                       "VALID", dimension_numbers=dn)
    out = jax.nn.relu(bn(out, params["bn1_g"], params["bn1_b"],
                         params["bn1_m"], params["bn1_v"]))
    out = jax.lax.conv_general_dilated(out, params["conv2_w"], (1, 1),
                                       [(1, 1), (1, 1)], dimension_numbers=dn)
    out = jax.nn.relu(bn(out, params["bn2_g"], params["bn2_b"],
                         params["bn2_m"], params["bn2_v"]))
    out = jax.lax.conv_general_dilated(out, params["conv3_w"], (1, 1),
                                       "VALID", dimension_numbers=dn)
    out = bn(out, params["bn3_g"], params["bn3_b"],
             params["bn3_m"], params["bn3_v"])
    return jax.nn.relu(out + x_nchw)


if __name__ == "__main__":
    key = jax.random.PRNGKey(0)
    k_x, k_p = jax.random.split(key)

    planes = 8
    in_planes = planes * 4          # downsample=None => residual shape match
    N, H, W = 2, 8, 8

    x = jax.random.normal(k_x, (N, in_planes, H, W), jnp.float32)
    params = make_params(k_p, in_planes, planes)

    out = bottleneck_forward(x, params, stride=1)
    out = jax.block_until_ready(out)

    ref = reference_forward(x, params)
    assert out.shape == (N, in_planes, H, W), out.shape
    max_err = float(jnp.max(jnp.abs(out - ref)))
    # bf16 activations/weights/residual (f32 accumulation) => looser tolerance.
    assert jnp.allclose(out, ref, atol=5e-2, rtol=5e-2), max_err

    print("KERNEL_OK")
</pallas_src>

<mosaic_0001>
module attributes {stable_mosaic.version = 11 : i64} {
  func.func @_mm_bias_relu_kernel(%arg0: i32, %arg1: memref<128x128xbf16, #tpu.memory_space<vmem>>, %arg2: memref<128x128xbf16, #tpu.memory_space<vmem>>, %arg3: memref<1x128xf32, #tpu.memory_space<vmem>>, %arg4: memref<128x128xbf16, #tpu.memory_space<vmem>>) attributes {dimension_semantics = [#tpu.dimension_semantics<parallel>], iteration_bounds = array<i64: 1>, scalar_prefetch = 0 : i64, scratch_operands = 0 : i64, tpu.core_type = #tpu.core_type<tc>, window_params = [{transform_indices = @transform_0, window_bounds = array<i64: 128, 128>}, {pipeline_mode = #tpu.pipeline_mode<synchronous>, transform_indices = @transform_1, window_bounds = array<i64: 128, 128>}, {pipeline_mode = #tpu.pipeline_mode<synchronous>, transform_indices = @transform_2, window_bounds = array<i64: 1, 128>}, {transform_indices = @transform_3, window_bounds = array<i64: 128, 128>}]} {
    %c0 = arith.constant 0 : index
    %c0_0 = arith.constant 0 : index
    %0 = vector.load %arg1[%c0, %c0_0] : memref<128x128xbf16, #tpu.memory_space<vmem>>, vector<128x128xbf16>
    %c0_1 = arith.constant 0 : index
    %c0_2 = arith.constant 0 : index
    %1 = vector.load %arg2[%c0_1, %c0_2] : memref<128x128xbf16, #tpu.memory_space<vmem>>, vector<128x128xbf16>
    %cst = arith.constant dense<0.000000e+00> : vector<128x128xf32>
    %2 = tpu.matmul %0, %1, %cst {dimension_numbers = #tpu.dot_dimension_numbers<[1], [0], [0], [1], [0, 0, 1, 1], [], []>} : vector<128x128xbf16>, vector<128x128xbf16>, vector<128x128xf32> -> vector<128x128xf32>
    %c0_3 = arith.constant 0 : index
    %c0_4 = arith.constant 0 : index
    %3 = vector.load %arg3[%c0_3, %c0_4] : memref<1x128xf32, #tpu.memory_space<vmem>>, vector<1x128xf32>
    %4 = vector.broadcast %3 : vector<1x128xf32> to vector<128x128xf32>
    %5 = arith.addf %2, %4 : vector<128x128xf32>
    %cst_5 = arith.constant 0.000000e+00 : f32
    %6 = vector.broadcast %cst_5 : f32 to vector<128x128xf32>
    %7 = arith.maximumf %5, %6 : vector<128x128xf32>
    %8 = arith.truncf %7 : vector<128x128xf32> to vector<128x128xbf16>
    %c0_6 = arith.constant 0 : index
    %c0_7 = arith.constant 0 : index
    %9 = vector.load %arg4[%c0_6, %c0_7] : memref<128x128xbf16, #tpu.memory_space<vmem>>, vector<128x128xbf16>
    tpu.vector_store %arg4[%c0_6, %c0_7], %8 {strides = array<i32>} : memref<128x128xbf16, #tpu.memory_space<vmem>>, vector<128x128xbf16>,
    return
  }
  func.func @transform_0(%arg0: i32) -> (i32, i32) {
    %c0_i32 = arith.constant 0 : i32
    %c0_i32_0 = arith.constant 0 : i32
    return %arg0, %c0_i32 : i32, i32
  }
  func.func @transform_1(%arg0: i32) -> (i32, i32) {
    %c0_i32 = arith.constant 0 : i32
    %c0_i32_0 = arith.constant 0 : i32
    %c0_i32_1 = arith.constant 0 : i32
    return %c0_i32, %c0_i32_0 : i32, i32
  }
  func.func @transform_2(%arg0: i32) -> (i32, i32) {
    %c0_i32 = arith.constant 0 : i32
    %c0_i32_0 = arith.constant 0 : i32
    %c0_i32_1 = arith.constant 0 : i32
    return %c0_i32, %c0_i32_0 : i32, i32
  }
  func.func @transform_3(%arg0: i32) -> (i32, i32) {
    %c0_i32 = arith.constant 0 : i32
    %c0_i32_0 = arith.constant 0 : i32
    return %arg0, %c0_i32 : i32, i32
  }
}

module attributes {stable_mosaic.version = 11 : i64} {
  func.func @kernel(%arg0: i32, %arg1: i32, %arg2: memref<1x104x128xbf16, #tpu.memory_space<vmem>>, %arg3: memref<9x128x128xbf16, #tpu.memory_space<vmem>>, %arg4: memref<1x128xf32, #tpu.memory_space<vmem>>, %arg5: memref<1x80x128xbf16, #tpu.memory_space<vmem>>) attributes {dimension_semantics = [#tpu.dimension_semantics<parallel>, #tpu.dimension_semantics<parallel>], iteration_bounds = array<i64: 2, 1>, scalar_prefetch = 0 : i64, scratch_operands = 0 : i64, tpu.core_type = #tpu.core_type<tc>, window_params = [{transform_indices = @transform_0, window_bounds = array<i64: 1, 104, 128>}, {transform_indices = @transform_1, window_bounds = array<i64: 9, 128, 128>}, {transform_indices = @transform_2, window_bounds = array<i64: 1, 128>}, {transform_indices = @transform_3, window_bounds = array<i64: 1, 80, 128>}]} {
    %cst = arith.constant 0.000000e+00 : f32
    %0 = vector.broadcast %cst : f32 to vector<80x128xf32>
    %c0 = arith.constant 0 : index
    %c0_0 = arith.constant 0 : index
    %c0_1 = arith.constant 0 : index
    %1 = vector.load %arg2[%c0, %c0_0, %c0_1] : memref<1x104x128xbf16, #tpu.memory_space<vmem>>, vector<1x80x128xbf16>
    %2 = vector.shape_cast %1 : vector<1x80x128xbf16> to vector<80x128xbf16>
    %c0_2 = arith.constant 0 : index
    %c0_3 = arith.constant 0 : index
    %c0_4 = arith.constant 0 : index
    %3 = vector.load %arg3[%c0_2, %c0_3, %c0_4] : memref<9x128x128xbf16, #tpu.memory_space<vmem>>, vector<1x128x128xbf16>
    %4 = vector.shape_cast %3 : vector<1x128x128xbf16> to vector<128x128xbf16>
    %cst_5 = arith.constant dense<0.000000e+00> : vector<80x128xf32>
    %5 = tpu.matmul %2, %4, %cst_5 {dimension_numbers = #tpu.dot_dimension_numbers<[1], [0], [0], [1], [0, 0, 1, 1], [], []>} : vector<80x128xbf16>, vector<128x128xbf16>, vector<80x128xf32> -> vector<80x128xf32>
    %6 = arith.addf %0, %5 : vector<80x128xf32>
    %c0_6 = arith.constant 0 : index
    %c1 = arith.constant 1 : index
    %c0_7 = arith.constant 0 : index
    %7 = vector.load %arg2[%c0_6, %c1, %c0_7] : memref<1x104x128xbf16, #tpu.memory_space<vmem>>, vector<1x80x128xbf16>
    %8 = vector.shape_cast %7 : vector<1x80x128xbf16> to vector<80x128xbf16>
    %c1_8 = arith.constant 1 : index
    %c0_9 = arith.constant 0 : index
    %c0_10 = arith.constant 0 : index
    %9 = vector.load %arg3[%c1_8, %c0_9, %c0_10] : memref<9x128x128xbf16, #tpu.memory_space<vmem>>, vector<1x128x128xbf16>
    %10 = vector.shape_cast %9 : vector<1x128x128xbf16> to vector<128x128xbf16>
    %cst_11 = arith.constant dense<0.000000e+00> : vector<80x128xf32>
    %11 = tpu.matmul %8, %10, %cst_11 {dimension_numbers = #tpu.dot_dimension_numbers<[1], [0], [0], [1], [0, 0, 1, 1], [], []>} : vector<80x128xbf16>, vector<128x128xbf16>, vector<80x128xf32> -> vector<80x128xf32>
    %12 = arith.addf %6, %11 : vector<80x128xf32>
    %c0_12 = arith.constant 0 : index
    %c2 = arith.constant 2 : index
    %c0_13 = arith.constant 0 : index
    %13 = vector.load %arg2[%c0_12, %c2, %c0_13] : memref<1x104x128xbf16, #tpu.memory_space<vmem>>, vector<1x80x128xbf16>
    %14 = vector.shape_cast %13 : vector<1x80x128xbf16> to vector<80x128xbf16>
    %c2_14 = arith.constant 2 : index
    %c0_15 = arith.constant 0 : index
    %c0_16 = arith.constant 0 : index
    %15 = vector.load %arg3[%c2_14, %c0_15, %c0_16] : memref<9x128x128xbf16, #tpu.memory_space<vmem>>, vector<1x128x128xbf16>
    %16 = vector.shape_cast %15 : vector<1x128x128xbf16> to vector<128x128xbf16>
    %cst_17 = arith.constant dense<0.000000e+00> : vector<80x128xf32>
    %17 = tpu.matmul %14, %16, %cst_17 {dimension_numbers = #tpu.dot_dimension_numbers<[1], [0], [0], [1], [0, 0, 1, 1], [], []>} : vector<80x128xbf16>, vector<128x128xbf16>, vector<80x128xf32> -> vector<80x128xf32>
    %18 = arith.addf %12, %17 : vector<80x128xf32>
    %c0_18 = arith.constant 0 : index
    %c10 = arith.constant 10 : index
    %c0_19 = arith.constant 0 : index
    %19 = vector.load %arg2[%c0_18, %c10, %c0_19] : memref<1x104x128xbf16, #tpu.memory_space<vmem>>, vector<1x80x128xbf16>
    %20 = vector.shape_cast %19 : vector<1x80x128xbf16> to vector<80x128xbf16>
    %c3 = arith.constant 3 : index
    %c0_20 = arith.constant 0 : index
    %c0_21 = arith.constant 0 : index
    %21 = vector.load %arg3[%c3, %c0_20, %c0_21] : memref<9x128x128xbf16, #tpu.memory_space<vmem>>, vector<1x128x128xbf16>
    %22 = vector.shape_cast %21 : vector<1x128x128xbf16> to vector<128x128xbf16>
    %cst_22 = arith.constant dense<0.000000e+00> : vector<80x128xf32>
    %23 = tpu.matmul %20, %22, %cst_22 {dimension_numbers = #tpu.dot_dimension_numbers<[1], [0], [0], [1], [0, 0, 1, 1], [], []>} : vector<80x128xbf16>, vector<128x128xbf16>, vector<80x128xf32> -> vector<80x128xf32>
    %24 = arith.addf %18, %23 : vector<80x128xf32>
    %c0_23 = arith.constant 0 : index
    %c11 = arith.constant 11 : index
    %c0_24 = arith.constant 0 : index
    %25 = vector.load %arg2[%c0_23, %c11, %c0_24] : memref<1x104x128xbf16, #tpu.memory_space<vmem>>, vector<1x80x128xbf16>
    %26 = vector.shape_cast %25 : vector<1x80x128xbf16> to vector<80x128xbf16>
    %c4 = arith.constant 4 : index
    %c0_25 = arith.constant 0 : index
    %c0_26 = arith.constant 0 : index
    %27 = vector.load %arg3[%c4, %c0_25, %c0_26] : memref<9x128x128xbf16, #tpu.memory_space<vmem>>, vector<1x128x128xbf16>
    %28 = vector.shape_cast %27 : vector<1x128x128xbf16> to vector<128x128xbf16>
    %cst_27 = arith.constant dense<0.000000e+00> : vector<80x128xf32>
    %29 = tpu.matmul %26, %28, %cst_27 {dimension_numbers = #tpu.dot_dimension_numbers<[1], [0], [0], [1], [0, 0, 1, 1], [], []>} : vector<80x128xbf16>, vector<128x128xbf16>, vector<80x128xf32> -> vector<80x128xf32>
    %30 = arith.addf %24, %29 : vector<80x128xf32>
    %c0_28 = arith.constant 0 : index
    %c12 = arith.constant 12 : index
    %c0_29 = arith.constant 0 : index
    %31 = vector.load %arg2[%c0_28, %c12, %c0_29] : memref<1x104x128xbf16, #tpu.memory_space<vmem>>, vector<1x80x128xbf16>
    %32 = vector.shape_cast %31 : vector<1x80x128xbf16> to vector<80x128xbf16>
    %c5 = arith.constant 5 : index
    %c0_30 = arith.constant 0 : index
    %c0_31 = arith.constant 0 : index
    %33 = vector.load %arg3[%c5, %c0_30, %c0_31] : memref<9x128x128xbf16, #tpu.memory_space<vmem>>, vector<1x128x128xbf16>
    %34 = vector.shape_cast %33 : vector<1x128x128xbf16> to vector<128x128xbf16>
    %cst_32 = arith.constant dense<0.000000e+00> : vector<80x128xf32>
    %35 = tpu.matmul %32, %34, %cst_32 {dimension_numbers = #tpu.dot_dimension_numbers<[1], [0], [0], [1], [0, 0, 1, 1], [], []>} : vector<80x128xbf16>, vector<128x128xbf16>, vector<80x128xf32> -> vector<80x128xf32>
    %36 = arith.addf %30, %35 : vector<80x128xf32>
    %c0_33 = arith.constant 0 : index
    %c20 = arith.constant 20 : index
    %c0_34 = arith.constant 0 : index
    %37 = vector.load %arg2[%c0_33, %c20, %c0_34] : memref<1x104x128xbf16, #tpu.memory_space<vmem>>, vector<1x80x128xbf16>
    %38 = vector.shape_cast %37 : vector<1x80x128xbf16> to vector<80x128xbf16>
    %c6 = arith.constant 6 : index
    %c0_35 = arith.constant 0 : index
    %c0_36 = arith.constant 0 : index
    %39 = vector.load %arg3[%c6, %c0_35, %c0_36] : memref<9x128x128xbf16, #tpu.memory_space<vmem>>, vector<1x128x128xbf16>
    %40 = vector.shape_cast %39 : vector<1x128x128xbf16> to vector<128x128xbf16>
    %cst_37 = arith.constant dense<0.000000e+00> : vector<80x128xf32>
    %41 = tpu.matmul %38, %40, %cst_37 {dimension_numbers = #tpu.dot_dimension_numbers<[1], [0], [0], [1], [0, 0, 1, 1], [], []>} : vector<80x128xbf16>, vector<128x128xbf16>, vector<80x128xf32> -> vector<80x128xf32>
    %42 = arith.addf %36, %41 : vector<80x128xf32>
    %c0_38 = arith.constant 0 : index
    %c21 = arith.constant 21 : index
    %c0_39 = arith.constant 0 : index
    %43 = vector.load %arg2[%c0_38, %c21, %c0_39] : memref<1x104x128xbf16, #tpu.memory_space<vmem>>, vector<1x80x128xbf16>
    %44 = vector.shape_cast %43 : vector<1x80x128xbf16> to vector<80x128xbf16>
    %c7 = arith.constant 7 : index
    %c0_40 = arith.constant 0 : index
    %c0_41 = arith.constant 0 : index
    %45 = vector.load %arg3[%c7, %c0_40, %c0_41] : memref<9x128x128xbf16, #tpu.memory_space<vmem>>, vector<1x128x128xbf16>
    %46 = vector.shape_cast %45 : vector<1x128x128xbf16> to vector<128x128xbf16>
    %cst_42 = arith.constant dense<0.000000e+00> : vector<80x128xf32>
    %47 = tpu.matmul %44, %46, %cst_42 {dimension_numbers = #tpu.dot_dimension_numbers<[1], [0], [0], [1], [0, 0, 1, 1], [], []>} : vector<80x128xbf16>, vector<128x128xbf16>, vector<80x128xf32> -> vector<80x128xf32>
    %48 = arith.addf %42, %47 : vector<80x128xf32>
    %c0_43 = arith.constant 0 : index
    %c22 = arith.constant 22 : index
    %c0_44 = arith.constant 0 : index
    %49 = vector.load %arg2[%c0_43, %c22, %c0_44] : memref<1x104x128xbf16, #tpu.memory_space<vmem>>, vector<1x80x128xbf16>
    %50 = vector.shape_cast %49 : vector<1x80x128xbf16> to vector<80x128xbf16>
    %c8 = arith.constant 8 : index
    %c0_45 = arith.constant 0 : index
    %c0_46 = arith.constant 0 : index
    %51 = vector.load %arg3[%c8, %c0_45, %c0_46] : memref<9x128x128xbf16, #tpu.memory_space<vmem>>, vector<1x128x128xbf16>
    %52 = vector.shape_cast %51 : vector<1x128x128xbf16> to vector<128x128xbf16>
    %cst_47 = arith.constant dense<0.000000e+00> : vector<80x128xf32>
    %53 = tpu.matmul %50, %52, %cst_47 {dimension_numbers = #tpu.dot_dimension_numbers<[1], [0], [0], [1], [0, 0, 1, 1], [], []>} : vector<80x128xbf16>, vector<128x128xbf16>, vector<80x128xf32> -> vector<80x128xf32>
    %54 = arith.addf %48, %53 : vector<80x128xf32>
    %c0_48 = arith.constant 0 : index
    %c0_49 = arith.constant 0 : index
    %55 = vector.load %arg4[%c0_48, %c0_49] : memref<1x128xf32, #tpu.memory_space<vmem>>, vector<1x128xf32>
    %56 = vector.broadcast %55 : vector<1x128xf32> to vector<80x128xf32>
    %57 = arith.addf %54, %56 : vector<80x128xf32>
    %cst_50 = arith.constant 0.000000e+00 : f32
    %58 = vector.broadcast %cst_50 : f32 to vector<80x128xf32>
    %59 = arith.maximumf %57, %58 : vector<80x128xf32>
    %60 = arith.truncf %59 : vector<80x128xf32> to vector<80x128xbf16>
    %c0_51 = arith.constant 0 : index
    %c0_52 = arith.constant 0 : index
    %c0_53 = arith.constant 0 : index
    %61 = vector.load %arg5[%c0_51, %c0_52, %c0_53] : memref<1x80x128xbf16, #tpu.memory_space<vmem>>, vector<1x80x128xbf16>
    %62 = vector.shape_cast %61 : vector<1x80x128xbf16> to vector<80x128xbf16>
    %63 = vector.shape_cast %60 : vector<80x128xbf16> to vector<1x80x128xbf16>
    tpu.vector_store %arg5[%c0_51, %c0_52, %c0_53], %63 {strides = array<i32>} : memref<1x80x128xbf16, #tpu.memory_space<vmem>>, vector<1x80x128xbf16>,
    return
  }
  func.func @transform_0(%arg0: i32, %arg1: i32) -> (i32, i32, i32) {
    %c0_i32 = arith.constant 0 : i32
    %c0_i32_0 = arith.constant 0 : i32
    %c0_i32_1 = arith.constant 0 : i32
    return %arg0, %c0_i32, %c0_i32_0 : i32, i32, i32
  }
  func.func @transform_1(%arg0: i32, %arg1: i32) -> (i32, i32, i32) {
    %c0_i32 = arith.constant 0 : i32
    %c0_i32_0 = arith.constant 0 : i32
    %c0_i32_1 = arith.constant 0 : i32
    return %c0_i32, %c0_i32_0, %arg1 : i32, i32, i32
  }
  func.func @transform_2(%arg0: i32, %arg1: i32) -> (i32, i32) {
    %c0_i32 = arith.constant 0 : i32
    %c0_i32_0 = arith.constant 0 : i32
    return %c0_i32, %arg1 : i32, i32
  }
  func.func @transform_3(%arg0: i32, %arg1: i32) -> (i32, i32, i32) {
    %c0_i32 = arith.constant 0 : i32
    %c0_i32_0 = arith.constant 0 : i32
    return %arg0, %c0_i32, %arg1 : i32, i32, i32
  }
}

module attributes {stable_mosaic.version = 11 : i64} {
  func.func @_mm_bias_res_relu_kernel(%arg0: i32, %arg1: memref<128x128xbf16, #tpu.memory_space<vmem>>, %arg2: memref<128x128xbf16, #tpu.memory_space<vmem>>, %arg3: memref<1x128xf32, #tpu.memory_space<vmem>>, %arg4: memref<128x128xbf16, #tpu.memory_space<vmem>>, %arg5: memref<128x128xbf16, #tpu.memory_space<vmem>>) attributes {dimension_semantics = [#tpu.dimension_semantics<parallel>], iteration_bounds = array<i64: 1>, scalar_prefetch = 0 : i64, scratch_operands = 0 : i64, tpu.core_type = #tpu.core_type<tc>, window_params = [{transform_indices = @transform_0, window_bounds = array<i64: 128, 128>}, {pipeline_mode = #tpu.pipeline_mode<synchronous>, transform_indices = @transform_1, window_bounds = array<i64: 128, 128>}, {pipeline_mode = #tpu.pipeline_mode<synchronous>, transform_indices = @transform_2, window_bounds = array<i64: 1, 128>}, {transform_indices = @transform_3, window_bounds = array<i64: 128, 128>}, {transform_indices = @transform_4, window_bounds = array<i64: 128, 128>}]} {
    %c0 = arith.constant 0 : index
    %c0_0 = arith.constant 0 : index
    %0 = vector.load %arg1[%c0, %c0_0] : memref<128x128xbf16, #tpu.memory_space<vmem>>, vector<128x128xbf16>
    %c0_1 = arith.constant 0 : index
    %c0_2 = arith.constant 0 : index
    %1 = vector.load %arg2[%c0_1, %c0_2] : memref<128x128xbf16, #tpu.memory_space<vmem>>, vector<128x128xbf16>
    %cst = arith.constant dense<0.000000e+00> : vector<128x128xf32>
    %2 = tpu.matmul %0, %1, %cst {dimension_numbers = #tpu.dot_dimension_numbers<[1], [0], [0], [1], [0, 0, 1, 1], [], []>} : vector<128x128xbf16>, vector<128x128xbf16>, vector<128x128xf32> -> vector<128x128xf32>
    %c0_3 = arith.constant 0 : index
    %c0_4 = arith.constant 0 : index
    %3 = vector.load %arg3[%c0_3, %c0_4] : memref<1x128xf32, #tpu.memory_space<vmem>>, vector<1x128xf32>
    %4 = vector.broadcast %3 : vector<1x128xf32> to vector<128x128xf32>
    %5 = arith.addf %2, %4 : vector<128x128xf32>
    %c0_5 = arith.constant 0 : index
    %c0_6 = arith.constant 0 : index
    %6 = vector.load %arg4[%c0_5, %c0_6] : memref<128x128xbf16, #tpu.memory_space<vmem>>, vector<128x128xbf16>
    %7 = arith.extf %6 : vector<128x128xbf16> to vector<128x128xf32>
    %8 = arith.addf %5, %7 : vector<128x128xf32>
    %cst_7 = arith.constant 0.000000e+00 : f32
    %9 = vector.broadcast %cst_7 : f32 to vector<128x128xf32>
    %10 = arith.maximumf %8, %9 : vector<128x128xf32>
    %11 = arith.truncf %10 : vector<128x128xf32> to vector<128x128xbf16>
    %c0_8 = arith.constant 0 : index
    %c0_9 = arith.constant 0 : index
    %12 = vector.load %arg5[%c0_8, %c0_9] : memref<128x128xbf16, #tpu.memory_space<vmem>>, vector<128x128xbf16>
    tpu.vector_store %arg5[%c0_8, %c0_9], %11 {strides = array<i32>} : memref<128x128xbf16, #tpu.memory_space<vmem>>, vector<128x128xbf16>,
    return
  }
  func.func @transform_0(%arg0: i32) -> (i32, i32) {
    %c0_i32 = arith.constant 0 : i32
    %c0_i32_0 = arith.constant 0 : i32
    return %arg0, %c0_i32 : i32, i32
  }
  func.func @transform_1(%arg0: i32) -> (i32, i32) {
    %c0_i32 = arith.constant 0 : i32
    %c0_i32_0 = arith.constant 0 : i32
    %c0_i32_1 = arith.constant 0 : i32
    return %c0_i32, %c0_i32_0 : i32, i32
  }
  func.func @transform_2(%arg0: i32) -> (i32, i32) {
    %c0_i32 = arith.constant 0 : i32
    %c0_i32_0 = arith.constant 0 : i32
    %c0_i32_1 = arith.constant 0 : i32
    return %c0_i32, %c0_i32_0 : i32, i32
  }
  func.func @transform_3(%arg0: i32) -> (i32, i32) {
    %c0_i32 = arith.constant 0 : i32
    %c0_i32_0 = arith.constant 0 : i32
    return %arg0, %c0_i32 : i32, i32
  }
  func.func @transform_4(%arg0: i32) -> (i32, i32) {
    %c0_i32 = arith.constant 0 : i32
    %c0_i32_0 = arith.constant 0 : i32
    return %arg0, %c0_i32 : i32, i32
  }
}

</mosaic_0001>

<llo_original>
// kernel: bottleneck_forward.3
$region0: #{bottleneck_forward.3}
  #allocation0 [shape = 'u32[]', space=smem, size = 0x4, offset = 0x4, fixed_abs, tag = 'smem constant byte address 0x4 - core index']
  #allocation1 [shape = 'u32[144,128]{1,0:T(1,128)}', space=vmem, size = 0x12000, scoped, tag = 'internal scratch']
  %s0 = inlined_call_operand.vmem [shape: bf16[128,128], index: 0, kind: input, shape index: {}]
  %s1 = inlined_call_operand.vmem [shape: bf16[128,128], index: 1, kind: input, shape index: {}]
  %s2 = inlined_call_operand.vmem [shape: f32[1,128], index: 2, kind: input, shape index: {}]
  %s3 = inlined_call_operand.vmem [shape: bf16[128,128], index: 3, kind: output, shape index: {}]
  %s4 = sld [smem:[#allocation0]]
  $region22: #{bottleneck_forward.3} parent=0
    _
  %s6 = ssub.s32 1, %s4
  %s7 = scalar_select 0, %s6, %s4
  // Predicated region
  $region2: #{bottleneck_forward.3} parent=0 // pred_check
    _
  $region3: #{bottleneck_forward.3} parent=0 // pred_check_branch
    %9 = sbr.rel (0) target = $region5
  $region4: #{bottleneck_forward.3} parent=0 // pred_region
    _
  $region5: #{bottleneck_forward.3} parent=0 // pred_fallthru
    _
  // Predicated region
  $region6: #{bottleneck_forward.3} parent=0 // pred_check
    _
  $region7: #{bottleneck_forward.3} parent=0 // pred_check_branch
    %11 = sbr.rel (0) target = $region9
  $region8: #{bottleneck_forward.3} parent=0 // pred_region
    _
  $region9: #{bottleneck_forward.3} parent=0 // pred_fallthru
    _
  // Predicated region
  $region10: #{bottleneck_forward.3} parent=0 // pred_check
    _
  $region11: #{bottleneck_forward.3} parent=0 // pred_check_branch
    %13 = sbr.rel (0) target = $region13
  $region12: #{bottleneck_forward.3} parent=0 // pred_region
    _
  $region13: #{bottleneck_forward.3} parent=0 // pred_fallthru
    _
  %v15 = vld [vmem:[%s0] sm:$0xf]
  %v16 = vld [vmem:[%s0 + $0x4] sm:$0xf]
  %v17 = vld [vmem:[%s0 + $0x8] sm:$0xf]
  %v18 = vld [vmem:[%s0 + $0xc] sm:$0xf]
  %v19 = vld [vmem:[%s0 + $0x10] sm:$0xf]
  %v20 = vld [vmem:[%s0 + $0x14] sm:$0xf]
  %v21 = vld [vmem:[%s0 + $0x18] sm:$0xf]
  %v22 = vld [vmem:[%s0 + $0x1c] sm:$0xf]
  %v23 = vld [vmem:[%s0 + $0x20] sm:$0xf]
  %v24 = vld [vmem:[%s0 + $0x24] sm:$0xf]
  %v25 = vld [vmem:[%s0 + $0x28] sm:$0xf]
  %v26 = vld [vmem:[%s0 + $0x2c] sm:$0xf]
  %v27 = vld [vmem:[%s0 + $0x30] sm:$0xf]
  %v28 = vld [vmem:[%s0 + $0x34] sm:$0xf]
  %v29 = vld [vmem:[%s0 + $0x38] sm:$0xf]
  %v30 = vld [vmem:[%s0 + $0x3c] sm:$0xf]
  %v31 = vld [vmem:[%s1] sm:$0xf]
  %v32 = vld [vmem:[%s1 + $0x4] sm:$0xf]
  %v33 = vld [vmem:[%s1 + $0x8] sm:$0xf]
  %v34 = vld [vmem:[%s1 + $0xc] sm:$0xf]
  %v35 = vld [vmem:[%s1 + $0x10] sm:$0xf]
  %v36 = vld [vmem:[%s1 + $0x14] sm:$0xf]
  %v37 = vld [vmem:[%s1 + $0x18] sm:$0xf]
  %v38 = vld [vmem:[%s1 + $0x1c] sm:$0xf]
  %v39 = vld [vmem:[%s1 + $0x20] sm:$0xf]
  %v40 = vld [vmem:[%s1 + $0x24] sm:$0xf]
  %v41 = vld [vmem:[%s1 + $0x28] sm:$0xf]
  %v42 = vld [vmem:[%s1 + $0x2c] sm:$0xf]
  %v43 = vld [vmem:[%s1 + $0x30] sm:$0xf]
  %v44 = vld [vmem:[%s1 + $0x34] sm:$0xf]
  %v45 = vld [vmem:[%s1 + $0x38] sm:$0xf]
  %v46 = vld [vmem:[%s1 + $0x3c] sm:$0xf]
  %v47 = vld [vmem:[%s2] sm:$0x1]
  %v49 = vlaneseq
  %v50 = vshrl.u32 %v49, 7
  %v51 = vsub.s32 0, %v50
  %v52 = vrot.slane %v47, %v51
  %v70 = vunpack.c.l.b16 %v15
  %v71 = vunpack.c.l.b16 %v16
  %v72 = vunpack.c.l.b16 %v17
  %v73 = vunpack.c.l.b16 %v18
  %v74 = vunpack.c.l.b16 %v19
  %v75 = vunpack.c.l.b16 %v20
  %v76 = vunpack.c.l.b16 %v21
  %v77 = vunpack.c.l.b16 %v22
  %v78 = vunpack.c.l.b16 %v23
  %v79 = vunpack.c.l.b16 %v24
  %v80 = vunpack.c.l.b16 %v25
  %v81 = vunpack.c.l.b16 %v26
  %v82 = vunpack.c.l.b16 %v27
  %v83 = vunpack.c.l.b16 %v28
  %v84 = vunpack.c.l.b16 %v29
  %v85 = vunpack.c.l.b16 %v30
  %v86 = vpack.c.b16 %v71, %v70
  %v87 = vpack.c.b16 %v73, %v72
  %v88 = vpack.c.b16 %v75, %v74
  %v89 = vpack.c.b16 %v77, %v76
  %v90 = vpack.c.b16 %v79, %v78
  %v91 = vpack.c.b16 %v81, %v80
  %v92 = vpack.c.b16 %v83, %v82
  %v93 = vpack.c.b16 %v85, %v84
  %v118 = vunpack.c.l.b16 %v31
  %v119 = vunpack.c.l.b16 %v32
  %v120 = vunpack.c.l.b16 %v33
  %v121 = vunpack.c.l.b16 %v34
  %v122 = vunpack.c.l.b16 %v35
  %v123 = vunpack.c.l.b16 %v36
  %v124 = vunpack.c.l.b16 %v37
  %v125 = vunpack.c.l.b16 %v38
  %v126 = vunpack.c.l.b16 %v39
  %v127 = vunpack.c.l.b16 %v40
  %v128 = vunpack.c.l.b16 %v41
  %v129 = vunpack.c.l.b16 %v42
  %v130 = vunpack.c.l.b16 %v43
  %v131 = vunpack.c.l.b16 %v44
  %v132 = vunpack.c.l.b16 %v45
  %v133 = vunpack.c.l.b16 %v46
  %v134 = vpack.c.b16 %v119, %v118
  %v135 = vpack.c.b16 %v121, %v120
  %v136 = vpack.c.b16 %v123, %v122
  %v137 = vpack.c.b16 %v125, %v124
  %v138 = vpack.c.b16 %v127, %v126
  %v139 = vpack.c.b16 %v129, %v128
  %v140 = vpack.c.b16 %v131, %v130
  %v141 = vpack.c.b16 %v133, %v132
  %150 = vmatprep.subr.bf16.mxu0 0
  %151 = vmatpush1.bf16.msra.mxu0 %v141
  %152 = vmatprep.subr.bf16.mxu0 0
  %153 = vmatpush1.bf16.msra.mxu0 %v140
  %154 = vmatprep.subr.bf16.mxu0 0
  %155 = vmatpush1.bf16.msra.mxu0 %v139
  %156 = vmatprep.subr.bf16.mxu0 0
  %157 = vmatpush1.bf16.msra.mxu0 %v138
  %158 = vmatprep.subr.bf16.mxu0 0
  %159 = vmatpush1.bf16.msra.mxu0 %v137
  %160 = vmatprep.subr.bf16.mxu0 0
  %161 = vmatpush1.bf16.msra.mxu0 %v136
  %162 = vmatprep.subr.bf16.mxu0 0
  %163 = vmatpush1.bf16.msra.mxu0 %v135
  %164 = vmatprep.subr.bf16.mxu0 0
  %165 = vmatpush1.bf16.msra.mxu0 %v134
  %166 = vmatprep.subr.bf16.mxu0 0
  %167 = vmatpush2.bf16.msra.mxu0 0
  %168 = vmatprep.subr.bf16.mxu0 0
  %169 = vmatpush2.bf16.msra.mxu0 0
  %170 = vmatprep.subr.bf16.mxu0 0
  %171 = vmatpush2.bf16.msra.mxu0 0
  %172 = vmatprep.subr.bf16.mxu0 0
  %173 = vmatpush2.bf16.msra.mxu0 0
  %174 = vmatprep.subr.bf16.mxu0 0
  %175 = vmatpush2.bf16.msra.mxu0 0
  %176 = vmatprep.subr.bf16.mxu0 0
  %177 = vmatpush2.bf16.msra.mxu0 0
  %178 = vmatprep.subr.bf16.mxu0 0
  %179 = vmatpush2.bf16.msra.mxu0 0
  %180 = vmatprep.subr.bf16.mxu0 0
  %181 = vmatpush2.bf16.msra.mxu0 0
  %182 = vmatprep.mubr.bf16.mxu0 0
  %183 = vmatmul.mubr.bf16.gmra.mxu0 %v86
  %v184 = vpop.f32.mrf.mxu0
  %v185 = vadd.f32 %v52, %v184
  %v186 = vpop.f32.mrf.mxu0
  %v187 = vpop.f32.mrf.mxu0
  %v188 = vadd.f32 %v52, %v187
  %v189 = vpop.f32.mrf.mxu0
  %190 = vmatprep.mubr.bf16.mxu0 0
  %191 = vmatmul.mubr.bf16.gmra.mxu0 %v87
  %v192 = vpop.f32.mrf.mxu0
  %v193 = vadd.f32 %v52, %v192
  %v194 = vpop.f32.mrf.mxu0
  %v195 = vpop.f32.mrf.mxu0
  %v196 = vadd.f32 %v52, %v195
  %v197 = vpop.f32.mrf.mxu0
  %198 = vmatprep.mubr.bf16.mxu0 0
  %199 = vmatmul.mubr.bf16.gmra.mxu0 %v88
  %v200 = vpop.f32.mrf.mxu0
  %v201 = vadd.f32 %v52, %v200
  %v202 = vpop.f32.mrf.mxu0
  %v203 = vpop.f32.mrf.mxu0
  %v204 = vadd.f32 %v52, %v203
  %v205 = vpop.f32.mrf.mxu0
  %206 = vmatprep.mubr.bf16.mxu0 0
  %207 = vmatmul.mubr.bf16.gmra.mxu0 %v89
  %v208 = vpop.f32.mrf.mxu0
  %v209 = vadd.f32 %v52, %v208
  %v210 = vpop.f32.mrf.mxu0
  %v211 = vpop.f32.mrf.mxu0
  %v212 = vadd.f32 %v52, %v211
  %v213 = vpop.f32.mrf.mxu0
  %214 = vmatprep.mubr.bf16.mxu0 0
  %215 = vmatmul.mubr.bf16.gmra.mxu0 %v90
  %v216 = vpop.f32.mrf.mxu0
  %v217 = vadd.f32 %v52, %v216
  %v218 = vpop.f32.mrf.mxu0
  %v219 = vpop.f32.mrf.mxu0
  %v220 = vadd.f32 %v52, %v219
  %v221 = vpop.f32.mrf.mxu0
  %222 = vmatprep.mubr.bf16.mxu0 0
  %223 = vmatmul.mubr.bf16.gmra.mxu0 %v91
  %v224 = vpop.f32.mrf.mxu0
  %v225 = vadd.f32 %v52, %v224
  %v226 = vpop.f32.mrf.mxu0
  %v227 = vpop.f32.mrf.mxu0
  %v228 = vadd.f32 %v52, %v227
  %v229 = vpop.f32.mrf.mxu0
  %230 = vmatprep.mubr.bf16.mxu0 0
  %231 = vmatmul.mubr.bf16.gmra.mxu0 %v92
  %v232 = vpop.f32.mrf.mxu0
  %v233 = vadd.f32 %v52, %v232
  %v234 = vpop.f32.mrf.mxu0
  %v235 = vpop.f32.mrf.mxu0
  %v236 = vadd.f32 %v52, %v235
  %v237 = vpop.f32.mrf.mxu0
  %238 = vmatprep.mubr.bf16.mxu0 0
  %239 = vmatmul.mubr.bf16.gmra.mxu0 %v93
  %v240 = vpop.f32.mrf.mxu0
  %v241 = vadd.f32 %v52, %v240
  %v242 = vpop.f32.mrf.mxu0
  %v243 = vpop.f32.mrf.mxu0
  %v244 = vadd.f32 %v52, %v243
  %v245 = vpop.f32.mrf.mxu0
  %246 = vdwg.mxu0
  %v247 = vmax.f32 %v185, 0.0
  %v248 = vmax.f32 %v188, 0.0
  %v249 = vmax.f32 %v193, 0.0
  %v250 = vmax.f32 %v196, 0.0
  %v251 = vmax.f32 %v201, 0.0
  %v252 = vmax.f32 %v204, 0.0
  %v253 = vmax.f32 %v209, 0.0
  %v254 = vmax.f32 %v212, 0.0
  %v255 = vmax.f32 %v217, 0.0
  %v256 = vmax.f32 %v220, 0.0
  %v257 = vmax.f32 %v225, 0.0
  %v258 = vmax.f32 %v228, 0.0
  %v259 = vmax.f32 %v233, 0.0
  %v260 = vmax.f32 %v236, 0.0
  %v261 = vmax.f32 %v241, 0.0
  %v262 = vmax.f32 %v244, 0.0
  %v263 = vpack.c.bf16 %v248, %v247
  %v264 = vpack.c.bf16 %v250, %v249
  %v265 = vpack.c.bf16 %v252, %v251
  %v266 = vpack.c.bf16 %v254, %v253
  %v267 = vpack.c.bf16 %v256, %v255
  %v268 = vpack.c.bf16 %v258, %v257
  %v269 = vpack.c.bf16 %v260, %v259
  %v270 = vpack.c.bf16 %v262, %v261
  %v279 = vunpack.c.l.b16 %v263
  %v280 = vunpack.c.h.b16 %v263
  %v281 = vunpack.c.l.b16 %v264
  %v282 = vunpack.c.h.b16 %v264
  %v283 = vunpack.c.l.b16 %v265
  %v284 = vunpack.c.h.b16 %v265
  %v285 = vunpack.c.l.b16 %v266
  %v286 = vunpack.c.h.b16 %v266
  %v287 = vunpack.c.l.b16 %v267
  %v288 = vunpack.c.h.b16 %v267
  %v289 = vunpack.c.l.b16 %v268
  %v290 = vunpack.c.h.b16 %v268
  %v291 = vunpack.c.l.b16 %v269
  %v292 = vunpack.c.h.b16 %v269
  %v293 = vunpack.c.l.b16 %v270
  %v294 = vunpack.c.h.b16 %v270
  %v295 = vpack.c.b16 %v279, %v279
  %v296 = vpack.c.b16 %v280, %v280
  %v297 = vpack.c.b16 %v281, %v281
  %v298 = vpack.c.b16 %v282, %v282
  %v299 = vpack.c.b16 %v283, %v283
  %v300 = vpack.c.b16 %v284, %v284
  %v301 = vpack.c.b16 %v285, %v285
  %v302 = vpack.c.b16 %v286, %v286
  %v303 = vpack.c.b16 %v287, %v287
  %v304 = vpack.c.b16 %v288, %v288
  %v305 = vpack.c.b16 %v289, %v289
  %v306 = vpack.c.b16 %v290, %v290
  %v307 = vpack.c.b16 %v291, %v291
  %v308 = vpack.c.b16 %v292, %v292
  %v309 = vpack.c.b16 %v293, %v293
  %v310 = vpack.c.b16 %v294, %v294
  %327 = vst [vmem:[%s3] sm:$0xf] %v295
  %328 = vst [vmem:[%s3 + $0x4] sm:$0xf] %v296
  %329 = vst [vmem:[%s3 + $0x8] sm:$0xf] %v297
  %330 = vst [vmem:[%s3 + $0xc] sm:$0xf] %v298
  %331 = vst [vmem:[%s3 + $0x10] sm:$0xf] %v299
  %332 = vst [vmem:[%s3 + $0x14] sm:$0xf] %v300
  %333 = vst [vmem:[%s3 + $0x18] sm:$0xf] %v301
  %334 = vst [vmem:[%s3 + $0x1c] sm:$0xf] %v302
  %335 = vst [vmem:[%s3 + $0x20] sm:$0xf] %v303
  %336 = vst [vmem:[%s3 + $0x24] sm:$0xf] %v304
  %337 = vst [vmem:[%s3 + $0x28] sm:$0xf] %v305
  %338 = vst [vmem:[%s3 + $0x2c] sm:$0xf] %v306
  %339 = vst [vmem:[%s3 + $0x30] sm:$0xf] %v307
  %340 = vst [vmem:[%s3 + $0x34] sm:$0xf] %v308
  %341 = vst [vmem:[%s3 + $0x38] sm:$0xf] %v309
  %342 = vst [vmem:[%s3 + $0x3c] sm:$0xf] %v310
  // Predicated region
  $region14: #{bottleneck_forward.3} parent=0 // pred_check
    _
  $region15: #{bottleneck_forward.3} parent=0 // pred_check_branch
    %344 = sbr.rel (0) target = $region17
  $region16: #{bottleneck_forward.3} parent=0 // pred_region
    _
  $region17: #{bottleneck_forward.3} parent=0 // pred_fallthru
    _
  // Predicated region
  $region18: #{bottleneck_forward.3} parent=0 // pred_check
    _
  $region19: #{bottleneck_forward.3} parent=0 // pred_check_branch
    %346 = sbr.rel (0) target = $region21
  $region20: #{bottleneck_forward.3} parent=0 // pred_region
    _
  $region21: #{bottleneck_forward.3} parent=0 // pred_fallthru
    _

// kernel: bottleneck_forward.5
$region0: #{bottleneck_forward.5}
  #allocation0 [shape = 'u32[]', space=smem, size = 0x4, offset = 0x4, fixed_abs, tag = 'smem constant byte address 0x4 - core index']
  #allocation1 [shape = 'u32[144,128]{1,0:T(1,128)}', space=vmem, size = 0x12000, scoped, tag = 'internal scratch']
  %s0 = inlined_call_operand.vmem [shape: bf16[128,128], index: 0, kind: input, shape index: {}]
  %s1 = inlined_call_operand.vmem [shape: bf16[128,128], index: 1, kind: input, shape index: {}]
  %s2 = inlined_call_operand.vmem [shape: f32[1,128], index: 2, kind: input, shape index: {}]
  %s3 = inlined_call_operand.vmem [shape: bf16[128,128], index: 3, kind: input, shape index: {}]
  %s4 = inlined_call_operand.vmem [shape: bf16[128,128], index: 4, kind: output, shape index: {}]
  %s5 = sld [smem:[#allocation0]]
  $region26: #{bottleneck_forward.5} parent=0
    _
  %s7 = ssub.s32 1, %s5
  %s8 = scalar_select 0, %s7, %s5
  // Predicated region
  $region2: #{bottleneck_forward.5} parent=0 // pred_check
    _
  $region3: #{bottleneck_forward.5} parent=0 // pred_check_branch
    %10 = sbr.rel (0) target = $region5
  $region4: #{bottleneck_forward.5} parent=0 // pred_region
    _
  $region5: #{bottleneck_forward.5} parent=0 // pred_fallthru
    _
  // Predicated region
  $region6: #{bottleneck_forward.5} parent=0 // pred_check
    _
  $region7: #{bottleneck_forward.5} parent=0 // pred_check_branch
    %12 = sbr.rel (0) target = $region9
  $region8: #{bottleneck_forward.5} parent=0 // pred_region
    _
  $region9: #{bottleneck_forward.5} parent=0 // pred_fallthru
    _
  // Predicated region
  $region10: #{bottleneck_forward.5} parent=0 // pred_check
    _
  $region11: #{bottleneck_forward.5} parent=0 // pred_check_branch
    %14 = sbr.rel (0) target = $region13
  $region12: #{bottleneck_forward.5} parent=0 // pred_region
    _
  $region13: #{bottleneck_forward.5} parent=0 // pred_fallthru
    _
  // Predicated region
  $region14: #{bottleneck_forward.5} parent=0 // pred_check
    _
  $region15: #{bottleneck_forward.5} parent=0 // pred_check_branch
    %16 = sbr.rel (0) target = $region17
  $region16: #{bottleneck_forward.5} parent=0 // pred_region
    _
  $region17: #{bottleneck_forward.5} parent=0 // pred_fallthru
    _
  %v18 = vld [vmem:[%s0] sm:$0xf]
  %v19 = vld [vmem:[%s0 + $0x4] sm:$0xf]
  %v20 = vld [vmem:[%s0 + $0x8] sm:$0xf]
  %v21 = vld [vmem:[%s0 + $0xc] sm:$0xf]
  %v22 = vld [vmem:[%s0 + $0x10] sm:$0xf]
  %v23 = vld [vmem:[%s0 + $0x14] sm:$0xf]
  %v24 = vld [vmem:[%s0 + $0x18] sm:$0xf]
  %v25 = vld [vmem:[%s0 + $0x1c] sm:$0xf]
  %v26 = vld [vmem:[%s0 + $0x20] sm:$0xf]
  %v27 = vld [vmem:[%s0 + $0x24] sm:$0xf]
  %v28 = vld [vmem:[%s0 + $0x28] sm:$0xf]
  %v29 = vld [vmem:[%s0 + $0x2c] sm:$0xf]
  %v30 = vld [vmem:[%s0 + $0x30] sm:$0xf]
  %v31 = vld [vmem:[%s0 + $0x34] sm:$0xf]
  %v32 = vld [vmem:[%s0 + $0x38] sm:$0xf]
  %v33 = vld [vmem:[%s0 + $0x3c] sm:$0xf]
  %v34 = vld [vmem:[%s1] sm:$0xf]
  %v35 = vld [vmem:[%s1 + $0x4] sm:$0xf]
  %v36 = vld [vmem:[%s1 + $0x8] sm:$0xf]
  %v37 = vld [vmem:[%s1 + $0xc] sm:$0xf]
  %v38 = vld [vmem:[%s1 + $0x10] sm:$0xf]
  %v39 = vld [vmem:[%s1 + $0x14] sm:$0xf]
  %v40 = vld [vmem:[%s1 + $0x18] sm:$0xf]
  %v41 = vld [vmem:[%s1 + $0x1c] sm:$0xf]
  %v42 = vld [vmem:[%s1 + $0x20] sm:$0xf]
  %v43 = vld [vmem:[%s1 + $0x24] sm:$0xf]
  %v44 = vld [vmem:[%s1 + $0x28] sm:$0xf]
  %v45 = vld [vmem:[%s1 + $0x2c] sm:$0xf]
  %v46 = vld [vmem:[%s1 + $0x30] sm:$0xf]
  %v47 = vld [vmem:[%s1 + $0x34] sm:$0xf]
  %v48 = vld [vmem:[%s1 + $0x38] sm:$0xf]
  %v49 = vld [vmem:[%s1 + $0x3c] sm:$0xf]
  %v50 = vld [vmem:[%s2] sm:$0x1]
  %v52 = vlaneseq
  %v53 = vshrl.u32 %v52, 7
  %v54 = vsub.s32 0, %v53
  %v55 = vrot.slane %v50, %v54
  %v73 = vunpack.c.l.b16 %v18
  %v74 = vunpack.c.l.b16 %v19
  %v75 = vunpack.c.l.b16 %v20
  %v76 = vunpack.c.l.b16 %v21
  %v77 = vunpack.c.l.b16 %v22
  %v78 = vunpack.c.l.b16 %v23
  %v79 = vunpack.c.l.b16 %v24
  %v80 = vunpack.c.l.b16 %v25
  %v81 = vunpack.c.l.b16 %v26
  %v82 = vunpack.c.l.b16 %v27
  %v83 = vunpack.c.l.b16 %v28
  %v84 = vunpack.c.l.b16 %v29
  %v85 = vunpack.c.l.b16 %v30
  %v86 = vunpack.c.l.b16 %v31
  %v87 = vunpack.c.l.b16 %v32
  %v88 = vunpack.c.l.b16 %v33
  %v89 = vpack.c.b16 %v74, %v73
  %v90 = vpack.c.b16 %v76, %v75
  %v91 = vpack.c.b16 %v78, %v77
  %v92 = vpack.c.b16 %v80, %v79
  %v93 = vpack.c.b16 %v82, %v81
  %v94 = vpack.c.b16 %v84, %v83
  %v95 = vpack.c.b16 %v86, %v85
  %v96 = vpack.c.b16 %v88, %v87
  %v121 = vunpack.c.l.b16 %v34
  %v122 = vunpack.c.l.b16 %v35
  %v123 = vunpack.c.l.b16 %v36
  %v124 = vunpack.c.l.b16 %v37
  %v125 = vunpack.c.l.b16 %v38
  %v126 = vunpack.c.l.b16 %v39
  %v127 = vunpack.c.l.b16 %v40
  %v128 = vunpack.c.l.b16 %v41
  %v129 = vunpack.c.l.b16 %v42
  %v130 = vunpack.c.l.b16 %v43
  %v131 = vunpack.c.l.b16 %v44
  %v132 = vunpack.c.l.b16 %v45
  %v133 = vunpack.c.l.b16 %v46
  %v134 = vunpack.c.l.b16 %v47
  %v135 = vunpack.c.l.b16 %v48
  %v136 = vunpack.c.l.b16 %v49
  %v137 = vpack.c.b16 %v122, %v121
  %v138 = vpack.c.b16 %v124, %v123
  %v139 = vpack.c.b16 %v126, %v125
  %v140 = vpack.c.b16 %v128, %v127
  %v141 = vpack.c.b16 %v130, %v129
  %v142 = vpack.c.b16 %v132, %v131
  %v143 = vpack.c.b16 %v134, %v133
  %v144 = vpack.c.b16 %v136, %v135
  %153 = vmatprep.subr.bf16.mxu0 0
  %154 = vmatpush1.bf16.msra.mxu0 %v144
  %155 = vmatprep.subr.bf16.mxu0 0
  %156 = vmatpush1.bf16.msra.mxu0 %v143
  %157 = vmatprep.subr.bf16.mxu0 0
  %158 = vmatpush1.bf16.msra.mxu0 %v142
  %159 = vmatprep.subr.bf16.mxu0 0
  %160 = vmatpush1.bf16.msra.mxu0 %v141
  %161 = vmatprep.subr.bf16.mxu0 0
  %162 = vmatpush1.bf16.msra.mxu0 %v140
  %163 = vmatprep.subr.bf16.mxu0 0
  %164 = vmatpush1.bf16.msra.mxu0 %v139
  %165 = vmatprep.subr.bf16.mxu0 0
  %166 = vmatpush1.bf16.msra.mxu0 %v138
  %167 = vmatprep.subr.bf16.mxu0 0
  %168 = vmatpush1.bf16.msra.mxu0 %v137
  %169 = vmatprep.subr.bf16.mxu0 0
  %170 = vmatpush2.bf16.msra.mxu0 0
  %171 = vmatprep.subr.bf16.mxu0 0
  %172 = vmatpush2.bf16.msra.mxu0 0
  %173 = vmatprep.subr.bf16.mxu0 0
  %174 = vmatpush2.bf16.msra.mxu0 0
  %175 = vmatprep.subr.bf16.mxu0 0
  %176 = vmatpush2.bf16.msra.mxu0 0
  %177 = vmatprep.subr.bf16.mxu0 0
  %178 = vmatpush2.bf16.msra.mxu0 0
  %179 = vmatprep.subr.bf16.mxu0 0
  %180 = vmatpush2.bf16.msra.mxu0 0
  %181 = vmatprep.subr.bf16.mxu0 0
  %182 = vmatpush2.bf16.msra.mxu0 0
  %183 = vmatprep.subr.bf16.mxu0 0
  %184 = vmatpush2.bf16.msra.mxu0 0
  %185 = vmatprep.mubr.bf16.mxu0 0
  %186 = vmatmul.mubr.bf16.gmra.mxu0 %v89
  %v187 = vpop.f32.mrf.mxu0
  %v188 = vadd.f32 %v55, %v187
  %v189 = vpop.f32.mrf.mxu0
  %v190 = vpop.f32.mrf.mxu0
  %v191 = vadd.f32 %v55, %v190
  %v192 = vpop.f32.mrf.mxu0
  %193 = vmatprep.mubr.bf16.mxu0 0
  %194 = vmatmul.mubr.bf16.gmra.mxu0 %v90
  %v195 = vpop.f32.mrf.mxu0
  %v196 = vadd.f32 %v55, %v195
  %v197 = vpop.f32.mrf.mxu0
  %v198 = vpop.f32.mrf.mxu0
  %v199 = vadd.f32 %v55, %v198
  %v200 = vpop.f32.mrf.mxu0
  %201 = vmatprep.mubr.bf16.mxu0 0
  %202 = vmatmul.mubr.bf16.gmra.mxu0 %v91
  %v203 = vpop.f32.mrf.mxu0
  %v204 = vadd.f32 %v55, %v203
  %v205 = vpop.f32.mrf.mxu0
  %v206 = vpop.f32.mrf.mxu0
  %v207 = vadd.f32 %v55, %v206
  %v208 = vpop.f32.mrf.mxu0
  %209 = vmatprep.mubr.bf16.mxu0 0
  %210 = vmatmul.mubr.bf16.gmra.mxu0 %v92
  %v211 = vpop.f32.mrf.mxu0
  %v212 = vadd.f32 %v55, %v211
  %v213 = vpop.f32.mrf.mxu0
  %v214 = vpop.f32.mrf.mxu0
  %v215 = vadd.f32 %v55, %v214
  %v216 = vpop.f32.mrf.mxu0
  %217 = vmatprep.mubr.bf16.mxu0 0
  %218 = vmatmul.mubr.bf16.gmra.mxu0 %v93
  %v219 = vpop.f32.mrf.mxu0
  %v220 = vadd.f32 %v55, %v219
  %v221 = vpop.f32.mrf.mxu0
  %v222 = vpop.f32.mrf.mxu0
  %v223 = vadd.f32 %v55, %v222
  %v224 = vpop.f32.mrf.mxu0
  %225 = vmatprep.mubr.bf16.mxu0 0
  %226 = vmatmul.mubr.bf16.gmra.mxu0 %v94
  %v227 = vpop.f32.mrf.mxu0
  %v228 = vadd.f32 %v55, %v227
  %v229 = vpop.f32.mrf.mxu0
  %v230 = vpop.f32.mrf.mxu0
  %v231 = vadd.f32 %v55, %v230
  %v232 = vpop.f32.mrf.mxu0
  %233 = vmatprep.mubr.bf16.mxu0 0
  %234 = vmatmul.mubr.bf16.gmra.mxu0 %v95
  %v235 = vpop.f32.mrf.mxu0
  %v236 = vadd.f32 %v55, %v235
  %v237 = vpop.f32.mrf.mxu0
  %v238 = vpop.f32.mrf.mxu0
  %v239 = vadd.f32 %v55, %v238
  %v240 = vpop.f32.mrf.mxu0
  %241 = vmatprep.mubr.bf16.mxu0 0
  %242 = vmatmul.mubr.bf16.gmra.mxu0 %v96
  %v243 = vpop.f32.mrf.mxu0
  %v244 = vadd.f32 %v55, %v243
  %v245 = vpop.f32.mrf.mxu0
  %v246 = vpop.f32.mrf.mxu0
  %v247 = vadd.f32 %v55, %v246
  %v248 = vpop.f32.mrf.mxu0
  %249 = vdwg.mxu0
  %v250 = vld [vmem:[%s3] sm:$0xf]
  %v251 = vld [vmem:[%s3 + $0x4] sm:$0xf]
  %v252 = vld [vmem:[%s3 + $0x8] sm:$0xf]
  %v253 = vld [vmem:[%s3 + $0xc] sm:$0xf]
  %v254 = vld [vmem:[%s3 + $0x10] sm:$0xf]
  %v255 = vld [vmem:[%s3 + $0x14] sm:$0xf]
  %v256 = vld [vmem:[%s3 + $0x18] sm:$0xf]
  %v257 = vld [vmem:[%s3 + $0x1c] sm:$0xf]
  %v258 = vld [vmem:[%s3 + $0x20] sm:$0xf]
  %v259 = vld [vmem:[%s3 + $0x24] sm:$0xf]
  %v260 = vld [vmem:[%s3 + $0x28] sm:$0xf]
  %v261 = vld [vmem:[%s3 + $0x2c] sm:$0xf]
  %v262 = vld [vmem:[%s3 + $0x30] sm:$0xf]
  %v263 = vld [vmem:[%s3 + $0x34] sm:$0xf]
  %v264 = vld [vmem:[%s3 + $0x38] sm:$0xf]
  %v265 = vld [vmem:[%s3 + $0x3c] sm:$0xf]
  %v266 = vunpack.c.l.bf16 %v250
  %v267 = vunpack.c.l.bf16 %v251
  %v268 = vunpack.c.l.bf16 %v252
  %v269 = vunpack.c.l.bf16 %v253
  %v270 = vunpack.c.l.bf16 %v254
  %v271 = vunpack.c.l.bf16 %v255
  %v272 = vunpack.c.l.bf16 %v256
  %v273 = vunpack.c.l.bf16 %v257
  %v274 = vunpack.c.l.bf16 %v258
  %v275 = vunpack.c.l.bf16 %v259
  %v276 = vunpack.c.l.bf16 %v260
  %v277 = vunpack.c.l.bf16 %v261
  %v278 = vunpack.c.l.bf16 %v262
  %v279 = vunpack.c.l.bf16 %v263
  %v280 = vunpack.c.l.bf16 %v264
  %v281 = vunpack.c.l.bf16 %v265
  %v282 = vadd.f32 %v188, %v266
  %v283 = vadd.f32 %v191, %v267
  %v284 = vadd.f32 %v196, %v268
  %v285 = vadd.f32 %v199, %v269
  %v286 = vadd.f32 %v204, %v270
  %v287 = vadd.f32 %v207, %v271
  %v288 = vadd.f32 %v212, %v272
  %v289 = vadd.f32 %v215, %v273
  %v290 = vadd.f32 %v220, %v274
  %v291 = vadd.f32 %v223, %v275
  %v292 = vadd.f32 %v228, %v276
  %v293 = vadd.f32 %v231, %v277
  %v294 = vadd.f32 %v236, %v278
  %v295 = vadd.f32 %v239, %v279
  %v296 = vadd.f32 %v244, %v280
  %v297 = vadd.f32 %v247, %v281
  %v298 = vmax.f32 %v282, 0.0
  %v299 = vmax.f32 %v283, 0.0
  %v300 = vmax.f32 %v284, 0.0
  %v301 = vmax.f32 %v285, 0.0
  %v302 = vmax.f32 %v286, 0.0
  %v303 = vmax.f32 %v287, 0.0
  %v304 = vmax.f32 %v288, 0.0
  %v305 = vmax.f32 %v289, 0.0
  %v306 = vmax.f32 %v290, 0.0
  %v307 = vmax.f32 %v291, 0.0
  %v308 = vmax.f32 %v292, 0.0
  %v309 = vmax.f32 %v293, 0.0
  %v310 = vmax.f32 %v294, 0.0
  %v311 = vmax.f32 %v295, 0.0
  %v312 = vmax.f32 %v296, 0.0
  %v313 = vmax.f32 %v297, 0.0
  %v314 = vpack.c.bf16 %v299, %v298
  %v315 = vpack.c.bf16 %v301, %v300
  %v316 = vpack.c.bf16 %v303, %v302
  %v317 = vpack.c.bf16 %v305, %v304
  %v318 = vpack.c.bf16 %v307, %v306
  %v319 = vpack.c.bf16 %v309, %v308
  %v320 = vpack.c.bf16 %v311, %v310
  %v321 = vpack.c.bf16 %v313, %v312
  %v330 = vunpack.c.l.b16 %v314
  %v331 = vunpack.c.h.b16 %v314
  %v332 = vunpack.c.l.b16 %v315
  %v333 = vunpack.c.h.b16 %v315
  %v334 = vunpack.c.l.b16 %v316
  %v335 = vunpack.c.h.b16 %v316
  %v336 = vunpack.c.l.b16 %v317
  %v337 = vunpack.c.h.b16 %v317
  %v338 = vunpack.c.l.b16 %v318
  %v339 = vunpack.c.h.b16 %v318
  %v340 = vunpack.c.l.b16 %v319
  %v341 = vunpack.c.h.b16 %v319
  %v342 = vunpack.c.l.b16 %v320
  %v343 = vunpack.c.h.b16 %v320
  %v344 = vunpack.c.l.b16 %v321
  %v345 = vunpack.c.h.b16 %v321
  %v346 = vpack.c.b16 %v330, %v330
  %v347 = vpack.c.b16 %v331, %v331
  %v348 = vpack.c.b16 %v332, %v332
  %v349 = vpack.c.b16 %v333, %v333
  %v350 = vpack.c.b16 %v334, %v334
  %v351 = vpack.c.b16 %v335, %v335
  %v352 = vpack.c.b16 %v336, %v336
  %v353 = vpack.c.b16 %v337, %v337
  %v354 = vpack.c.b16 %v338, %v338
  %v355 = vpack.c.b16 %v339, %v339
  %v356 = vpack.c.b16 %v340, %v340
  %v357 = vpack.c.b16 %v341, %v341
  %v358 = vpack.c.b16 %v342, %v342
  %v359 = vpack.c.b16 %v343, %v343
  %v360 = vpack.c.b16 %v344, %v344
  %v361 = vpack.c.b16 %v345, %v345
  %378 = vst [vmem:[%s4] sm:$0xf] %v346
  %379 = vst [vmem:[%s4 + $0x4] sm:$0xf] %v347
  %380 = vst [vmem:[%s4 + $0x8] sm:$0xf] %v348
  %381 = vst [vmem:[%s4 + $0xc] sm:$0xf] %v349
  %382 = vst [vmem:[%s4 + $0x10] sm:$0xf] %v350
  %383 = vst [vmem:[%s4 + $0x14] sm:$0xf] %v351
  %384 = vst [vmem:[%s4 + $0x18] sm:$0xf] %v352
  %385 = vst [vmem:[%s4 + $0x1c] sm:$0xf] %v353
  %386 = vst [vmem:[%s4 + $0x20] sm:$0xf] %v354
  %387 = vst [vmem:[%s4 + $0x24] sm:$0xf] %v355
  %388 = vst [vmem:[%s4 + $0x28] sm:$0xf] %v356
  %389 = vst [vmem:[%s4 + $0x2c] sm:$0xf] %v357
  %390 = vst [vmem:[%s4 + $0x30] sm:$0xf] %v358
  %391 = vst [vmem:[%s4 + $0x34] sm:$0xf] %v359
  %392 = vst [vmem:[%s4 + $0x38] sm:$0xf] %v360
  %393 = vst [vmem:[%s4 + $0x3c] sm:$0xf] %v361
  // Predicated region
  $region18: #{bottleneck_forward.5} parent=0 // pred_check
    _
  $region19: #{bottleneck_forward.5} parent=0 // pred_check_branch
    %395 = sbr.rel (0) target = $region21
  $region20: #{bottleneck_forward.5} parent=0 // pred_region
    _
  $region21: #{bottleneck_forward.5} parent=0 // pred_fallthru
    _
  // Predicated region
  $region22: #{bottleneck_forward.5} parent=0 // pred_check
    _
  $region23: #{bottleneck_forward.5} parent=0 // pred_check_branch
    %397 = sbr.rel (0) target = $region25
  $region24: #{bottleneck_forward.5} parent=0 // pred_region
    _
  $region25: #{bottleneck_forward.5} parent=0 // pred_fallthru
    _

// kernel: bottleneck_forward.4
$region0: #{bottleneck_forward.4}
  #allocation0 [shape = 'u32[]', space=smem, size = 0x4, offset = 0x4, fixed_abs, tag = 'smem constant byte address 0x4 - core index']
  #allocation1 [shape = 'u32[144,128]{1,0:T(1,128)}', space=vmem, size = 0x12000, scoped, tag = 'internal scratch']
  %s0 = inlined_call_operand.vmem [shape: bf16[2,104,128], index: 0, kind: input, shape index: {}]
  %s1 = inlined_call_operand.vmem [shape: bf16[9,128,128], index: 1, kind: input, shape index: {}]
  %s2 = inlined_call_operand.vmem [shape: f32[1,128], index: 2, kind: input, shape index: {}]
  %s3 = inlined_call_operand.vmem [shape: bf16[2,80,128], index: 3, kind: output, shape index: {}]
  %s4 = sld [smem:[#allocation0]]
  $region45: #{bottleneck_forward.4} parent=0
    _
  %s6 = ssub.s32 1, %s4
  %s7 = scalar_select 0, %s6, %s4
  loop: start=0, step=1, limit=4
  $region2: #{bottleneck_forward.4} parent=0 // loop_pre_header
    _
  $region3: #{bottleneck_forward.4} parent=0 // loop_header
    %s9 = sphi 0, %s13
    %p10 = scmp.ge.s32.totalorder %s9, 4
    %s16 = sphi 0, %s28
    %s17 = sphi 0, %s24
    %s18 = sphi 0, %s16
    %s19 = sphi 0, %s17
    %s20 = sphi 0, %s18
    %s21 = sphi 0, %s19
    %s31 = sphi 0, %s33
    %s34 = sphi 0, %s31
    %s35 = sphi 0, %s34
    %s51 = sphi 0, %s35
    %s57 = sphi 0, %s59
    %s60 = sphi 0, %s57
    %s61 = sphi 0, %s60
    %s77 = sphi 0, %s61
    %s83 = sphi 0, %s85
    %s86 = sphi 0, %s83
    %s87 = sphi 0, %s86
    %s103 = sphi 0, %s87
    %s111 = sphi 0, %s113
    %s114 = sphi 0, %s111
    %s115 = sphi 0, %s114
    %s131 = sphi 0, %s115
  $region4: #{bottleneck_forward.4} parent=0 // loop_header_branch
    %12 = sbr.rel (%p10) target = $region8
  $region5: #{bottleneck_forward.4} parent=0 // loop_body
    %s14 = ssub.s32 %s9, 1
    %s15 = ssub.s32 %s9, 2
    %s22 = sadd.s32 1, %s17
    %p23 = scmp.ge.s32.totalorder %s22, 1
    %s24 = scalar_select %p23, 0, %s22
    %s25 = sadd.s32 1, %s16
    %s26 = scalar_select %p23, %s25, %s16
    %p27 = scmp.ge.s32.totalorder %s26, 2
    %s28 = scalar_select %p27, 0, %s26
    %s29 = ssub.s32 %s16, %s28
    %p30 = scmp.eq.s32.totalorder %s29, 0
    %s32 = sadd.s32 %s31, 1
    %s33 = scalar_select %p30, %s31, %s32
    %p36 = pneg %p30
    %p37 = scmp.eq.s32.totalorder %s9, 1
    %p38 = por %p36, %p37
    %p39 = scmp.ne.s32.totalorder %s31, %s34
    %p40 = scmp.eq.s32.totalorder %s9, 0
    %p41 = por %p39, %p40
    %p42 = scmp.ne.s32.totalorder %s31, %s34
    %p43 = scmp.eq.s32.totalorder %s14, 1
    %p44 = por %p42, %p43
    %p45 = scmp.ne.s32.totalorder %s34, %s35
    %p46 = scmp.eq.s32.totalorder %s14, 0
    %p47 = por %p45, %p46
    %p48 = scmp.ne.s32.totalorder %s34, %s35
    %p49 = scmp.eq.s32.totalorder %s15, 1
    %p50 = por %p48, %p49
    %p52 = scmp.ne.s32.totalorder %s35, %s51
    %p53 = scmp.eq.s32.totalorder %s15, 0
    %p54 = por %p52, %p53
    %s55 = ssub.s32 %s17, %s24
    %p56 = scmp.eq.s32.totalorder %s55, 0
    %s58 = sadd.s32 %s57, 1
    %s59 = scalar_select %p56, %s57, %s58
    %p62 = pneg %p56
    %p63 = scmp.eq.s32.totalorder %s9, 1
    %p64 = por %p62, %p63
    %p65 = scmp.ne.s32.totalorder %s57, %s60
    %p66 = scmp.eq.s32.totalorder %s9, 0
    %p67 = por %p65, %p66
    %p68 = scmp.ne.s32.totalorder %s57, %s60
    %p69 = scmp.eq.s32.totalorder %s14, 1
    %p70 = por %p68, %p69
    %p71 = scmp.ne.s32.totalorder %s60, %s61
    %p72 = scmp.eq.s32.totalorder %s14, 0
    %p73 = por %p71, %p72
    %p74 = scmp.ne.s32.totalorder %s60, %s61
    %p75 = scmp.eq.s32.totalorder %s15, 1
    %p76 = por %p74, %p75
    %p78 = scmp.ne.s32.totalorder %s61, %s77
    %p79 = scmp.eq.s32.totalorder %s15, 0
    %p80 = por %p78, %p79
    %s81 = ssub.s32 %s17, %s24
    %p82 = scmp.eq.s32.totalorder %s81, 0
    %s84 = sadd.s32 %s83, 1
    %s85 = scalar_select %p82, %s83, %s84
    %p88 = pneg %p82
    %p89 = scmp.eq.s32.totalorder %s9, 1
    %p90 = por %p88, %p89
    %p91 = scmp.ne.s32.totalorder %s83, %s86
    %p92 = scmp.eq.s32.totalorder %s9, 0
    %p93 = por %p91, %p92
    %p94 = scmp.ne.s32.totalorder %s83, %s86
    %p95 = scmp.eq.s32.totalorder %s14, 1
    %p96 = por %p94, %p95
    %p97 = scmp.ne.s32.totalorder %s86, %s87
    %p98 = scmp.eq.s32.totalorder %s14, 0
    %p99 = por %p97, %p98
    %p100 = scmp.ne.s32.totalorder %s86, %s87
    %p101 = scmp.eq.s32.totalorder %s15, 1
    %p102 = por %p100, %p101
    %p104 = scmp.ne.s32.totalorder %s87, %s103
    %p105 = scmp.eq.s32.totalorder %s15, 0
    %p106 = por %p104, %p105
    %s107 = ssub.s32 %s16, %s28
    %s108 = ssub.s32 %s17, %s24
    %s109 = sor.u32 %s107, %s108
    %p110 = scmp.eq.s32.totalorder %s109, 0
    %s112 = sadd.s32 %s111, 1
    %s113 = scalar_select %p110, %s111, %s112
    %p116 = pneg %p110
    %p117 = scmp.eq.s32.totalorder %s9, 1
    %p118 = por %p116, %p117
    %p119 = scmp.ne.s32.totalorder %s111, %s114
    %p120 = scmp.eq.s32.totalorder %s9, 0
    %p121 = por %p119, %p120
    %p122 = scmp.ne.s32.totalorder %s111, %s114
    %p123 = scmp.eq.s32.totalorder %s14, 1
    %p124 = por %p122, %p123
    %p125 = scmp.ne.s32.totalorder %s114, %s115
    %p126 = scmp.eq.s32.totalorder %s14, 0
    %p127 = por %p125, %p126
    %p128 = scmp.ne.s32.totalorder %s114, %s115
    %p129 = scmp.eq.s32.totalorder %s15, 1
    %p130 = por %p128, %p129
    %p132 = scmp.ne.s32.totalorder %s115, %s131
    %p133 = scmp.eq.s32.totalorder %s15, 0
    %p134 = por %p132, %p133
    %p135 = scmp.le.s32.totalorder 1, %s9
    %p136 = scmp.lt.s32.totalorder %s9, 3
    %p137 = pnand %p135, %p136
    %p138 = pneg %p137
    // Predicated region
    $region9: #{bottleneck_forward.4} parent=5 // pred_check
      _
    $region10: #{bottleneck_forward.4} parent=5 // pred_check_branch
      %140 = sbr.rel (%p137) target = $region12
    $region11: #{bottleneck_forward.4} parent=5 // pred_region
      %s141 = ssub.s32 %s9, 1
      // Predicated region
      $region13: #{bottleneck_forward.4} parent=11 // pred_check
        %p142 = pneg %p73
      $region14: #{bottleneck_forward.4} parent=11 // pred_check_branch
        %144 = sbr.rel (%p142) target = $region16
      $region15: #{bottleneck_forward.4} parent=11 // pred_region
        %p145 = scmp.lt.s32.totalorder %s19, 0
        %s146 = scalar_select %p145, %s19, 0
        %s147 = smul.addr %s146, 4
        %s148 = scalar_lea.vmem %s1, %s147
      $region16: #{bottleneck_forward.4} parent=11 // pred_fallthru
        _
      // Predicated region
      $region17: #{bottleneck_forward.4} parent=11 // pred_check
        %p149 = pneg %p99
      $region18: #{bottleneck_forward.4} parent=11 // pred_check_branch
        %151 = sbr.rel (%p149) target = $region20
      $region19: #{bottleneck_forward.4} parent=11 // pred_region
        %p152 = scmp.lt.s32.totalorder %s19, 0
        %s153 = scalar_select %p152, %s19, 0
        %s154 = scalar_lea.vmem %s2, %s153
      $region20: #{bottleneck_forward.4} parent=11 // pred_fallthru
        _
    $region12: #{bottleneck_forward.4} parent=5 // pred_fallthru
      _
    %p155 = scmp.lt.s32.totalorder %s9, 2
    // Predicated region
    $region21: #{bottleneck_forward.4} parent=5 // pred_check
      %p156 = pneg %p155
    $region22: #{bottleneck_forward.4} parent=5 // pred_check_branch
      %158 = sbr.rel (%p156) target = $region24
    $region23: #{bottleneck_forward.4} parent=5 // pred_region
      // Predicated region
      $region25: #{bottleneck_forward.4} parent=23 // pred_check
        %p159 = pneg %p41
      $region26: #{bottleneck_forward.4} parent=23 // pred_check_branch
        %161 = sbr.rel (%p159) target = $region28
      $region27: #{bottleneck_forward.4} parent=23 // pred_region
        %p162 = scmp.lt.s32.totalorder %s16, 1
        %s163 = scalar_select %p162, %s16, 1
        %s164 = smul.addr %s163, 13
        %s165 = smul.addr %s164, 4
        %s166 = scalar_lea.vmem %s0, %s165
      $region28: #{bottleneck_forward.4} parent=23 // pred_fallthru
        _
    $region24: #{bottleneck_forward.4} parent=5 // pred_fallthru
      _
    %p167 = scmp.le.s32.totalorder 1, %s9
    %p168 = scmp.lt.s32.totalorder %s9, 3
    %p169 = pnand %p167, %p168
    %p170 = pneg %p169
    // Predicated region
    $region29: #{bottleneck_forward.4} parent=5 // pred_check
      _
    $region30: #{bottleneck_forward.4} parent=5 // pred_check_branch
      %172 = sbr.rel (%p169) target = $region32
    $region31: #{bottleneck_forward.4} parent=5 // pred_region
      %s173 = ssub.s32 %s9, 1
      %p174 = scmp.lt.s32.totalorder %s18, 1
      %s175 = scalar_select %p174, %s18, 1
      %s176 = smul.addr %s175, 13
      %s177 = smul.addr %s176, 4
      %s178 = scalar_lea.vmem %s0, %s177
      %p179 = pneg %p47
      %p180 = pneg %p44
      %p181 = scmp.lt.s32.totalorder %s19, 0
      %s182 = scalar_select %p181, %s19, 0
      %s183 = smul.addr %s182, 4
      %s184 = scalar_lea.vmem %s1, %s183
      %p185 = pneg %p73
      %p186 = pneg %p70
      %p187 = scmp.lt.s32.totalorder %s19, 0
      %s188 = scalar_select %p187, %s19, 0
      %s189 = scalar_lea.vmem %s2, %s188
      %p190 = pneg %p99
      %p191 = pneg %p96
      %p192 = pneg %p127
      %p193 = pneg %p124
      %p194 = scmp.lt.s32.totalorder %s18, 1
      %s195 = scalar_select %p194, %s18, 1
      %p196 = scmp.lt.s32.totalorder %s19, 0
      %s197 = scalar_select %p196, %s19, 0
      %s198 = smul.addr %s195, 10
      %s199 = sadd.s32 %s197, %s198
      %s200 = smul.addr %s199, 4
      %s201 = scalar_lea.vmem %s3, %s200
      %p202 = scmp.lt.s32.totalorder %s18, 1
      %s203 = scalar_select %p202, %s18, 1
      %s204 = smul.addr %s203, 13
      %s205 = smul.addr %s204, 4
      %s206 = scalar_lea.vmem %s0, %s205
      %p207 = scmp.lt.s32.totalorder %s19, 0
      %s208 = scalar_select %p207, %s19, 0
      %s209 = smul.addr %s208, 4
      %s210 = scalar_lea.vmem %s1, %s209
      %p211 = scmp.lt.s32.totalorder %s19, 0
      %s212 = scalar_select %p211, %s19, 0
      %s213 = scalar_lea.vmem %s2, %s212
      %p214 = scmp.lt.s32.totalorder %s18, 1
      %s215 = scalar_select %p214, %s18, 1
      %p216 = scmp.lt.s32.totalorder %s19, 0
      %s217 = scalar_select %p216, %s19, 0
      %s218 = smul.addr %s215, 10
      %s219 = sadd.s32 %s217, %s218
      %s220 = smul.addr %s219, 4
      %s221 = scalar_lea.vmem %s3, %s220
      %v223 = vld [vmem:[%s206] sm:$0xf]
      %v224 = vld [vmem:[%s206 + $0x4] sm:$0xf]
      %v225 = vld [vmem:[%s206 + $0x8] sm:$0xf]
      %v226 = vld [vmem:[%s206 + $0xc] sm:$0xf]
      %v227 = vld [vmem:[%s206 + $0x10] sm:$0xf]
      %v228 = vld [vmem:[%s206 + $0x14] sm:$0xf]
      %v229 = vld [vmem:[%s206 + $0x18] sm:$0xf]
      %v230 = vld [vmem:[%s206 + $0x1c] sm:$0xf]
      %v231 = vld [vmem:[%s206 + $0x20] sm:$0xf]
      %v232 = vld [vmem:[%s206 + $0x24] sm:$0xf]
      %v233 = vld [vmem:[%s210] sm:$0xf]
      %v234 = vld [vmem:[%s210 + $0x4] sm:$0xf]
      %v235 = vld [vmem:[%s210 + $0x8] sm:$0xf]
      %v236 = vld [vmem:[%s210 + $0xc] sm:$0xf]
      %v237 = vld [vmem:[%s210 + $0x10] sm:$0xf]
      %v238 = vld [vmem:[%s210 + $0x14] sm:$0xf]
      %v239 = vld [vmem:[%s210 + $0x18] sm:$0xf]
      %v240 = vld [vmem:[%s210 + $0x1c] sm:$0xf]
      %v241 = vld [vmem:[%s210 + $0x20] sm:$0xf]
      %v242 = vld [vmem:[%s210 + $0x24] sm:$0xf]
      %v243 = vld [vmem:[%s210 + $0x28] sm:$0xf]
      %v244 = vld [vmem:[%s210 + $0x2c] sm:$0xf]
      %v245 = vld [vmem:[%s210 + $0x30] sm:$0xf]
      %v246 = vld [vmem:[%s210 + $0x34] sm:$0xf]
      %v247 = vld [vmem:[%s210 + $0x38] sm:$0xf]
      %v248 = vld [vmem:[%s210 + $0x3c] sm:$0xf]
      %v249 = vld [vmem:[%s206 + $0x28] sm:$0x1]
      %s250 = scalar_lea.vmem %s210, 64
      %v251 = vld [vmem:[%s250] sm:$0xf]
      %v252 = vld [vmem:[%s250 + $0x4] sm:$0xf]
      %v253 = vld [vmem:[%s250 + $0x8] sm:$0xf]
      %v254 = vld [vmem:[%s250 + $0xc] sm:$0xf]
      %v255 = vld [vmem:[%s250 + $0x10] sm:$0xf]
      %v256 = vld [vmem:[%s250 + $0x14] sm:$0xf]
      %v257 = vld [vmem:[%s250 + $0x18] sm:$0xf]
      %v258 = vld [vmem:[%s250 + $0x1c] sm:$0xf]
      %v259 = vld [vmem:[%s250 + $0x20] sm:$0xf]
      %v260 = vld [vmem:[%s250 + $0x24] sm:$0xf]
      %v261 = vld [vmem:[%s250 + $0x28] sm:$0xf]
      %v262 = vld [vmem:[%s250 + $0x2c] sm:$0xf]
      %v263 = vld [vmem:[%s250 + $0x30] sm:$0xf]
      %v264 = vld [vmem:[%s250 + $0x34] sm:$0xf]
      %v265 = vld [vmem:[%s250 + $0x38] sm:$0xf]
      %v266 = vld [vmem:[%s250 + $0x3c] sm:$0xf]
      %v278 = vunpack.c.l.b16 %v223
      %v279 = vunpack.c.l.b16 %v224
      %v280 = vunpack.c.l.b16 %v225
      %v281 = vunpack.c.l.b16 %v226
      %v282 = vunpack.c.l.b16 %v227
      %v283 = vunpack.c.l.b16 %v228
      %v284 = vunpack.c.l.b16 %v229
      %v285 = vunpack.c.l.b16 %v230
      %v286 = vunpack.c.l.b16 %v231
      %v287 = vunpack.c.l.b16 %v232
      %v288 = vunpack.c.l.b16 %v249
      %v289 = vpack.c.b16 %v279, %v278
      %v290 = vpack.c.b16 %v281, %v280
      %v291 = vpack.c.b16 %v283, %v282
      %v292 = vpack.c.b16 %v285, %v284
      %v293 = vpack.c.b16 %v287, %v286
      %v294 = vpack.c.b16 %v288, %v288
      %vm295 = vsmask.f32 7424
      %v297 = vshrl.u32 %v289, 16
      %v299 = vshll.u32 %v289, 16
      %v301 = vrot.slane %v299, 1
      %v302 = vor.u32 %v297, %v301
      %v304 = vshll.u32 %v290, 16
      %v306 = vrot.slane %v304, 1
      %v307 = vsel %vm295, %v302, %v306
      %v308 = vshrl.u32 %v290, 16
      %v310 = vor.u32 %v308, %v306
      %v312 = vshll.u32 %v291, 16
      %v314 = vrot.slane %v312, 1
      %v315 = vsel %vm295, %v310, %v314
      %v316 = vshrl.u32 %v291, 16
      %v318 = vor.u32 %v316, %v314
      %v320 = vshll.u32 %v292, 16
      %v322 = vrot.slane %v320, 1
      %v323 = vsel %vm295, %v318, %v322
      %v324 = vshrl.u32 %v292, 16
      %v326 = vor.u32 %v324, %v322
      %v328 = vshll.u32 %v293, 16
      %v330 = vrot.slane %v328, 1
      %v331 = vsel %vm295, %v326, %v330
      %v332 = vshrl.u32 %v293, 16
      %v334 = vor.u32 %v332, %v330
      %v336 = vshll.u32 %v294, 16
      %v338 = vrot.slane %v336, 1
      %v339 = vsel %vm295, %v334, %v338
      %v361 = vunpack.c.l.b16 %v251
      %v362 = vunpack.c.l.b16 %v252
      %v363 = vunpack.c.l.b16 %v253
      %v364 = vunpack.c.l.b16 %v254
      %v365 = vunpack.c.l.b16 %v255
      %v366 = vunpack.c.l.b16 %v256
      %v367 = vunpack.c.l.b16 %v257
      %v368 = vunpack.c.l.b16 %v258
      %v369 = vunpack.c.l.b16 %v259
      %v370 = vunpack.c.l.b16 %v260
      %v371 = vunpack.c.l.b16 %v261
      %v372 = vunpack.c.l.b16 %v262
      %v373 = vunpack.c.l.b16 %v263
      %v374 = vunpack.c.l.b16 %v264
      %v375 = vunpack.c.l.b16 %v265
      %v376 = vunpack.c.l.b16 %v266
      %v377 = vpack.c.b16 %v362, %v361
      %v378 = vpack.c.b16 %v364, %v363
      %v379 = vpack.c.b16 %v366, %v365
      %v380 = vpack.c.b16 %v368, %v367
      %v381 = vpack.c.b16 %v370, %v369
      %v382 = vpack.c.b16 %v372, %v371
      %v383 = vpack.c.b16 %v374, %v373
      %v384 = vpack.c.b16 %v376, %v375
      %393 = vmatprep.subr.bf16.mxu0 0
      %394 = vmatpush1.bf16.msra.mxu0 %v384
      %395 = vmatprep.subr.bf16.mxu0 0
      %396 = vmatpush1.bf16.msra.mxu0 %v383
      %397 = vmatprep.subr.bf16.mxu0 0
      %398 = vmatpush1.bf16.msra.mxu0 %v382
      %399 = vmatprep.subr.bf16.mxu0 0
      %400 = vmatpush1.bf16.msra.mxu0 %v381
      %401 = vmatprep.subr.bf16.mxu0 0
      %402 = vmatpush1.bf16.msra.mxu0 %v380
      %403 = vmatprep.subr.bf16.mxu0 0
      %404 = vmatpush1.bf16.msra.mxu0 %v379
      %405 = vmatprep.subr.bf16.mxu0 0
      %406 = vmatpush1.bf16.msra.mxu0 %v378
      %407 = vmatprep.subr.bf16.mxu0 0
      %408 = vmatpush1.bf16.msra.mxu0 %v377
      %409 = vmatprep.subr.bf16.mxu0 0
      %410 = vmatpush2.bf16.msra.mxu0 0
      %411 = vmatprep.subr.bf16.mxu0 0
      %412 = vmatpush2.bf16.msra.mxu0 0
      %413 = vmatprep.subr.bf16.mxu0 0
      %414 = vmatpush2.bf16.msra.mxu0 0
      %415 = vmatprep.subr.bf16.mxu0 0
      %416 = vmatpush2.bf16.msra.mxu0 0
      %417 = vmatprep.subr.bf16.mxu0 0
      %418 = vmatpush2.bf16.msra.mxu0 0
      %419 = vmatprep.subr.bf16.mxu0 0
      %420 = vmatpush2.bf16.msra.mxu0 0
      %421 = vmatprep.subr.bf16.mxu0 0
      %422 = vmatpush2.bf16.msra.mxu0 0
      %423 = vmatprep.subr.bf16.mxu0 0
      %424 = vmatpush2.bf16.msra.mxu0 0
      %425 = vmatprep.mubr.bf16.mxu0 0
      %426 = vmatmul.mubr.bf16.gmra.mxu0 %v307
      %v427 = vpop.f32.mrf.mxu0
      %v428 = vadd.f32 0.0, %v427
      %v429 = vpop.f32.mrf.mxu0
      %v430 = vpop.f32.mrf.mxu0
      %v431 = vadd.f32 0.0, %v430
      %v432 = vpop.f32.mrf.mxu0
      %433 = vmatprep.mubr.bf16.mxu0 0
      %434 = vmatmul.mubr.bf16.gmra.mxu0 %v315
      %v435 = vpop.f32.mrf.mxu0
      %v436 = vadd.f32 0.0, %v435
      %v437 = vpop.f32.mrf.mxu0
      %v438 = vpop.f32.mrf.mxu0
      %v439 = vadd.f32 0.0, %v438
      %v440 = vpop.f32.mrf.mxu0
      %441 = vmatprep.mubr.bf16.mxu0 0
      %442 = vmatmul.mubr.bf16.gmra.mxu0 %v323
      %v443 = vpop.f32.mrf.mxu0
      %v444 = vadd.f32 0.0, %v443
      %v445 = vpop.f32.mrf.mxu0
      %v446 = vpop.f32.mrf.mxu0
      %v447 = vadd.f32 0.0, %v446
      %v448 = vpop.f32.mrf.mxu0
      %449 = vmatprep.mubr.bf16.mxu0 0
      %450 = vmatmul.mubr.bf16.gmra.mxu0 %v331
      %v451 = vpop.f32.mrf.mxu0
      %v452 = vadd.f32 0.0, %v451
      %v453 = vpop.f32.mrf.mxu0
      %v454 = vpop.f32.mrf.mxu0
      %v455 = vadd.f32 0.0, %v454
      %v456 = vpop.f32.mrf.mxu0
      %457 = vmatprep.mubr.bf16.mxu0 0
      %458 = vmatmul.mubr.bf16.gmra.mxu0 %v339
      %v459 = vpop.f32.mrf.mxu0
      %v460 = vadd.f32 0.0, %v459
      %v461 = vpop.f32.mrf.mxu0
      %v462 = vpop.f32.mrf.mxu0
      %v463 = vadd.f32 0.0, %v462
      %v464 = vpop.f32.mrf.mxu0
      %465 = vdwg.mxu0
      %v487 = vunpack.c.l.b16 %v233
      %v488 = vunpack.c.l.b16 %v234
      %v489 = vunpack.c.l.b16 %v235
      %v490 = vunpack.c.l.b16 %v236
      %v491 = vunpack.c.l.b16 %v237
      %v492 = vunpack.c.l.b16 %v238
      %v493 = vunpack.c.l.b16 %v239
      %v494 = vunpack.c.l.b16 %v240
      %v495 = vunpack.c.l.b16 %v241
      %v496 = vunpack.c.l.b16 %v242
      %v497 = vunpack.c.l.b16 %v243
      %v498 = vunpack.c.l.b16 %v244
      %v499 = vunpack.c.l.b16 %v245
      %v500 = vunpack.c.l.b16 %v246
      %v501 = vunpack.c.l.b16 %v247
      %v502 = vunpack.c.l.b16 %v248
      %v503 = vpack.c.b16 %v488, %v487
      %v504 = vpack.c.b16 %v490, %v489
      %v505 = vpack.c.b16 %v492, %v491
      %v506 = vpack.c.b16 %v494, %v493
      %v507 = vpack.c.b16 %v496, %v495
      %v508 = vpack.c.b16 %v498, %v497
      %v509 = vpack.c.b16 %v500, %v499
      %v510 = vpack.c.b16 %v502, %v501
      %519 = vmatprep.subr.bf16.mxu0 0
      %520 = vmatpush1.bf16.msra.mxu0 %v510
      %521 = vmatprep.subr.bf16.mxu0 0
      %522 = vmatpush1.bf16.msra.mxu0 %v509
      %523 = vmatprep.subr.bf16.mxu0 0
      %524 = vmatpush1.bf16.msra.mxu0 %v508
      %525 = vmatprep.subr.bf16.mxu0 0
      %526 = vmatpush1.bf16.msra.mxu0 %v507
      %527 = vmatprep.subr.bf16.mxu0 0
      %528 = vmatpush1.bf16.msra.mxu0 %v506
      %529 = vmatprep.subr.bf16.mxu0 0
      %530 = vmatpush1.bf16.msra.mxu0 %v505
      %531 = vmatprep.subr.bf16.mxu0 0
      %532 = vmatpush1.bf16.msra.mxu0 %v504
      %533 = vmatprep.subr.bf16.mxu0 0
      %534 = vmatpush1.bf16.msra.mxu0 %v503
      %535 = vmatprep.subr.bf16.mxu0 0
      %536 = vmatpush2.bf16.msra.mxu0 0
      %537 = vmatprep.subr.bf16.mxu0 0
      %538 = vmatpush2.bf16.msra.mxu0 0
      %539 = vmatprep.subr.bf16.mxu0 0
      %540 = vmatpush2.bf16.msra.mxu0 0
      %541 = vmatprep.subr.bf16.mxu0 0
      %542 = vmatpush2.bf16.msra.mxu0 0
      %543 = vmatprep.subr.bf16.mxu0 0
      %544 = vmatpush2.bf16.msra.mxu0 0
      %545 = vmatprep.subr.bf16.mxu0 0
      %546 = vmatpush2.bf16.msra.mxu0 0
      %547 = vmatprep.subr.bf16.mxu0 0
      %548 = vmatpush2.bf16.msra.mxu0 0
      %549 = vmatprep.subr.bf16.mxu0 0
      %550 = vmatpush2.bf16.msra.mxu0 0
      %551 = vmatprep.mubr.bf16.mxu0 0
      %552 = vmatmul.mubr.bf16.gmra.mxu0 %v289
      %v553 = vpop.f32.mrf.mxu0
      %v554 = vadd.f32 %v428, %v553
      %v555 = vpop.f32.mrf.mxu0
      %v556 = vpop.f32.mrf.mxu0
      %v557 = vadd.f32 %v431, %v556
      %v558 = vpop.f32.mrf.mxu0
      %559 = vmatprep.mubr.bf16.mxu0 0
      %560 = vmatmul.mubr.bf16.gmra.mxu0 %v290
      %v561 = vpop.f32.mrf.mxu0
      %v562 = vadd.f32 %v436, %v561
      %v563 = vpop.f32.mrf.mxu0
      %v564 = vpop.f32.mrf.mxu0
      %v565 = vadd.f32 %v439, %v564
      %v566 = vpop.f32.mrf.mxu0
      %567 = vmatprep.mubr.bf16.mxu0 0
      %568 = vmatmul.mubr.bf16.gmra.mxu0 %v291
      %v569 = vpop.f32.mrf.mxu0
      %v570 = vadd.f32 %v444, %v569
      %v571 = vpop.f32.mrf.mxu0
      %v572 = vpop.f32.mrf.mxu0
      %v573 = vadd.f32 %v447, %v572
      %v574 = vpop.f32.mrf.mxu0
      %575 = vmatprep.mubr.bf16.mxu0 0
      %576 = vmatmul.mubr.bf16.gmra.mxu0 %v292
      %v577 = vpop.f32.mrf.mxu0
      %v578 = vadd.f32 %v452, %v577
      %v579 = vpop.f32.mrf.mxu0
      %v580 = vpop.f32.mrf.mxu0
      %v581 = vadd.f32 %v455, %v580
      %v582 = vpop.f32.mrf.mxu0
      %583 = vmatprep.mubr.bf16.mxu0 0
      %584 = vmatmul.mubr.bf16.gmra.mxu0 %v293
      %v585 = vpop.f32.mrf.mxu0
      %v586 = vadd.f32 %v460, %v585
      %v587 = vpop.f32.mrf.mxu0
      %v588 = vpop.f32.mrf.mxu0
      %v589 = vadd.f32 %v463, %v588
      %v590 = vpop.f32.mrf.mxu0
      %591 = vdwg.mxu0
      %v592 = vld [vmem:[%s206] sm:$0xe]
      %s593 = scalar_lea.vmem %s210, 128
      %v594 = vld [vmem:[%s593] sm:$0xf]
      %v595 = vld [vmem:[%s593 + $0x4] sm:$0xf]
      %v596 = vld [vmem:[%s593 + $0x8] sm:$0xf]
      %v597 = vld [vmem:[%s593 + $0xc] sm:$0xf]
      %v598 = vld [vmem:[%s593 + $0x10] sm:$0xf]
      %v599 = vld [vmem:[%s593 + $0x14] sm:$0xf]
      %v600 = vld [vmem:[%s593 + $0x18] sm:$0xf]
      %v601 = vld [vmem:[%s593 + $0x1c] sm:$0xf]
      %v602 = vld [vmem:[%s593 + $0x20] sm:$0xf]
      %v603 = vld [vmem:[%s593 + $0x24] sm:$0xf]
      %v604 = vld [vmem:[%s593 + $0x28] sm:$0xf]
      %v605 = vld [vmem:[%s593 + $0x2c] sm:$0xf]
      %v606 = vld [vmem:[%s593 + $0x30] sm:$0xf]
      %v607 = vld [vmem:[%s593 + $0x34] sm:$0xf]
      %v608 = vld [vmem:[%s593 + $0x38] sm:$0xf]
      %v609 = vld [vmem:[%s593 + $0x3c] sm:$0xf]
      %v611 = vunpack.c.l.b16 %v592
      %v612 = vpack.c.b16 %v279, %v611
      %vm613 = vcmask 1046528
      %v614 = vrot.slane %v612, 1
      %v615 = vrot.slane %v290, 1
      %v616 = vsel %vm613, %v614, %v615
      %v617 = vrot.slane %v291, 1
      %v618 = vsel %vm613, %v615, %v617
      %v619 = vrot.slane %v292, 1
      %v620 = vsel %vm613, %v617, %v619
      %v621 = vrot.slane %v293, 1
      %v622 = vsel %vm613, %v619, %v621
      %v623 = vrot.slane %v294, 1
      %v624 = vsel %vm613, %v621, %v623
      %v646 = vunpack.c.l.b16 %v594
      %v647 = vunpack.c.l.b16 %v595
      %v648 = vunpack.c.l.b16 %v596
      %v649 = vunpack.c.l.b16 %v597
      %v650 = vunpack.c.l.b16 %v598
      %v651 = vunpack.c.l.b16 %v599
      %v652 = vunpack.c.l.b16 %v600
      %v653 = vunpack.c.l.b16 %v601
      %v654 = vunpack.c.l.b16 %v602
      %v655 = vunpack.c.l.b16 %v603
      %v656 = vunpack.c.l.b16 %v604
      %v657 = vunpack.c.l.b16 %v605
      %v658 = vunpack.c.l.b16 %v606
      %v659 = vunpack.c.l.b16 %v607
      %v660 = vunpack.c.l.b16 %v608
      %v661 = vunpack.c.l.b16 %v609
      %v662 = vpack.c.b16 %v647, %v646
      %v663 = vpack.c.b16 %v649, %v648
      %v664 = vpack.c.b16 %v651, %v650
      %v665 = vpack.c.b16 %v653, %v652
      %v666 = vpack.c.b16 %v655, %v654
      %v667 = vpack.c.b16 %v657, %v656
      %v668 = vpack.c.b16 %v659, %v658
      %v669 = vpack.c.b16 %v661, %v660
      %678 = vmatprep.subr.bf16.mxu0 0
      %679 = vmatpush1.bf16.msra.mxu0 %v669
      %680 = vmatprep.subr.bf16.mxu0 0
      %681 = vmatpush1.bf16.msra.mxu0 %v668
      %682 = vmatprep.subr.bf16.mxu0 0
      %683 = vmatpush1.bf16.msra.mxu0 %v667
      %684 = vmatprep.subr.bf16.mxu0 0
      %685 = vmatpush1.bf16.msra.mxu0 %v666
      %686 = vmatprep.subr.bf16.mxu0 0
      %687 = vmatpush1.bf16.msra.mxu0 %v665
      %688 = vmatprep.subr.bf16.mxu0 0
      %689 = vmatpush1.bf16.msra.mxu0 %v664
      %690 = vmatprep.subr.bf16.mxu0 0
      %691 = vmatpush1.bf16.msra.mxu0 %v663
      %692 = vmatprep.subr.bf16.mxu0 0
      %693 = vmatpush1.bf16.msra.mxu0 %v662
      %694 = vmatprep.subr.bf16.mxu0 0
      %695 = vmatpush2.bf16.msra.mxu0 0
      %696 = vmatprep.subr.bf16.mxu0 0
      %697 = vmatpush2.bf16.msra.mxu0 0
      %698 = vmatprep.subr.bf16.mxu0 0
      %699 = vmatpush2.bf16.msra.mxu0 0
      %700 = vmatprep.subr.bf16.mxu0 0
      %701 = vmatpush2.bf16.msra.mxu0 0
      %702 = vmatprep.subr.bf16.mxu0 0
      %703 = vmatpush2.bf16.msra.mxu0 0
      %704 = vmatprep.subr.bf16.mxu0 0
      %705 = vmatpush2.bf16.msra.mxu0 0
      %706 = vmatprep.subr.bf16.mxu0 0
      %707 = vmatpush2.bf16.msra.mxu0 0
      %708 = vmatprep.subr.bf16.mxu0 0
      %709 = vmatpush2.bf16.msra.mxu0 0
      %710 = vmatprep.mubr.bf16.mxu0 0
      %711 = vmatmul.mubr.bf16.gmra.mxu0 %v616
      %v712 = vpop.f32.mrf.mxu0
      %v713 = vadd.f32 0.0, %v712
      %v714 = vpop.f32.mrf.mxu0
      %v715 = vpop.f32.mrf.mxu0
      %v716 = vadd.f32 0.0, %v715
      %v717 = vpop.f32.mrf.mxu0
      %718 = vmatprep.mubr.bf16.mxu0 0
      %719 = vmatmul.mubr.bf16.gmra.mxu0 %v618
      %v720 = vpop.f32.mrf.mxu0
      %v721 = vadd.f32 0.0, %v720
      %v722 = vpop.f32.mrf.mxu0
      %v723 = vpop.f32.mrf.mxu0
      %v724 = vadd.f32 0.0, %v723
      %v725 = vpop.f32.mrf.mxu0
      %726 = vmatprep.mubr.bf16.mxu0 0
      %727 = vmatmul.mubr.bf16.gmra.mxu0 %v620
      %v728 = vpop.f32.mrf.mxu0
      %v729 = vadd.f32 0.0, %v728
      %v730 = vpop.f32.mrf.mxu0
      %v731 = vpop.f32.mrf.mxu0
      %v732 = vadd.f32 0.0, %v731
      %v733 = vpop.f32.mrf.mxu0
      %734 = vmatprep.mubr.bf16.mxu0 0
      %735 = vmatmul.mubr.bf16.gmra.mxu0 %v622
      %v736 = vpop.f32.mrf.mxu0
      %v737 = vadd.f32 0.0, %v736
      %v738 = vpop.f32.mrf.mxu0
      %v739 = vpop.f32.mrf.mxu0
      %v740 = vadd.f32 0.0, %v739
      %v741 = vpop.f32.mrf.mxu0
      %742 = vmatprep.mubr.bf16.mxu0 0
      %743 = vmatmul.mubr.bf16.gmra.mxu0 %v624
      %v744 = vpop.f32.mrf.mxu0
      %v745 = vadd.f32 0.0, %v744
      %v746 = vpop.f32.mrf.mxu0
      %v747 = vpop.f32.mrf.mxu0
      %v748 = vadd.f32 0.0, %v747
      %v749 = vpop.f32.mrf.mxu0
      %750 = vdwg.mxu0
      %v751 = vadd.f32 %v554, %v713
      %v752 = vadd.f32 %v557, %v716
      %v753 = vadd.f32 %v562, %v721
      %v754 = vadd.f32 %v565, %v724
      %v755 = vadd.f32 %v570, %v729
      %v756 = vadd.f32 %v573, %v732
      %v757 = vadd.f32 %v578, %v737
      %v758 = vadd.f32 %v581, %v740
      %v759 = vadd.f32 %v586, %v745
      %v760 = vadd.f32 %v589, %v748
      %v761 = vld [vmem:[%s206 + $0x4] sm:$0xe]
      %v762 = vld [vmem:[%s206 + $0x8] sm:$0xf]
      %v763 = vld [vmem:[%s206 + $0xc] sm:$0xf]
      %v764 = vld [vmem:[%s206 + $0x10] sm:$0xf]
      %v765 = vld [vmem:[%s206 + $0x14] sm:$0xf]
      %v766 = vld [vmem:[%s206 + $0x18] sm:$0xf]
      %v767 = vld [vmem:[%s206 + $0x1c] sm:$0xf]
      %v768 = vld [vmem:[%s206 + $0x20] sm:$0xf]
      %v769 = vld [vmem:[%s206 + $0x24] sm:$0xf]
      %v770 = vld [vmem:[%s206 + $0x28] sm:$0xf]
      %v771 = vld [vmem:[%s206 + $0x2c] sm:$0x1]
      %s772 = scalar_lea.vmem %s210, 192
      %v773 = vld [vmem:[%s772] sm:$0xf]
      %v774 = vld [vmem:[%s772 + $0x4] sm:$0xf]
      %v775 = vld [vmem:[%s772 + $0x8] sm:$0xf]
      %v776 = vld [vmem:[%s772 + $0xc] sm:$0xf]
      %v777 = vld [vmem:[%s772 + $0x10] sm:$0xf]
      %v778 = vld [vmem:[%s772 + $0x14] sm:$0xf]
      %v779 = vld [vmem:[%s772 + $0x18] sm:$0xf]
      %v780 = vld [vmem:[%s772 + $0x1c] sm:$0xf]
      %v781 = vld [vmem:[%s772 + $0x20] sm:$0xf]
      %v782 = vld [vmem:[%s772 + $0x24] sm:$0xf]
      %v783 = vld [vmem:[%s772 + $0x28] sm:$0xf]
      %v784 = vld [vmem:[%s772 + $0x2c] sm:$0xf]
      %v785 = vld [vmem:[%s772 + $0x30] sm:$0xf]
      %v786 = vld [vmem:[%s772 + $0x34] sm:$0xf]
      %v787 = vld [vmem:[%s772 + $0x38] sm:$0xf]
      %v788 = vld [vmem:[%s772 + $0x3c] sm:$0xf]
      %v800 = vunpack.c.l.b16 %v761
      %v801 = vunpack.c.l.b16 %v762
      %v802 = vunpack.c.l.b16 %v763
      %v803 = vunpack.c.l.b16 %v764
      %v804 = vunpack.c.l.b16 %v765
      %v805 = vunpack.c.l.b16 %v766
      %v806 = vunpack.c.l.b16 %v767
      %v807 = vunpack.c.l.b16 %v768
      %v808 = vunpack.c.l.b16 %v769
      %v809 = vunpack.c.l.b16 %v770
      %v810 = vunpack.c.l.b16 %v771
      %v811 = vpack.c.b16 %v801, %v800
      %v812 = vpack.c.b16 %v803, %v802
      %v813 = vpack.c.b16 %v805, %v804
      %v814 = vpack.c.b16 %v807, %v806
      %v815 = vpack.c.b16 %v809, %v808
      %v816 = vpack.c.b16 %v810, %v810
      %v817 = vrot.slane %v811, 1
      %v818 = vrot.slane %v812, 1
      %v819 = vsel %vm613, %v817, %v818
      %v820 = vrot.slane %v813, 1
      %v821 = vsel %vm613, %v818, %v820
      %v822 = vrot.slane %v814, 1
      %v823 = vsel %vm613, %v820, %v822
      %v824 = vrot.slane %v815, 1
      %v825 = vsel %vm613, %v822, %v824
      %v826 = vrot.slane %v816, 1
      %v827 = vsel %vm613, %v824, %v826
      %v849 = vunpack.c.l.b16 %v773
      %v850 = vunpack.c.l.b16 %v774
      %v851 = vunpack.c.l.b16 %v775
      %v852 = vunpack.c.l.b16 %v776
      %v853 = vunpack.c.l.b16 %v777
      %v854 = vunpack.c.l.b16 %v778
      %v855 = vunpack.c.l.b16 %v779
      %v856 = vunpack.c.l.b16 %v780
      %v857 = vunpack.c.l.b16 %v781
      %v858 = vunpack.c.l.b16 %v782
      %v859 = vunpack.c.l.b16 %v783
      %v860 = vunpack.c.l.b16 %v784
      %v861 = vunpack.c.l.b16 %v785
      %v862 = vunpack.c.l.b16 %v786
      %v863 = vunpack.c.l.b16 %v787
      %v864 = vunpack.c.l.b16 %v788
      %v865 = vpack.c.b16 %v850, %v849
      %v866 = vpack.c.b16 %v852, %v851
      %v867 = vpack.c.b16 %v854, %v853
      %v868 = vpack.c.b16 %v856, %v855
      %v869 = vpack.c.b16 %v858, %v857
      %v870 = vpack.c.b16 %v860, %v859
      %v871 = vpack.c.b16 %v862, %v861
      %v872 = vpack.c.b16 %v864, %v863
      %881 = vmatprep.subr.bf16.mxu0 0
      %882 = vmatpush1.bf16.msra.mxu0 %v872
      %883 = vmatprep.subr.bf16.mxu0 0
      %884 = vmatpush1.bf16.msra.mxu0 %v871
      %885 = vmatprep.subr.bf16.mxu0 0
      %886 = vmatpush1.bf16.msra.mxu0 %v870
      %887 = vmatprep.subr.bf16.mxu0 0
      %888 = vmatpush1.bf16.msra.mxu0 %v869
      %889 = vmatprep.subr.bf16.mxu0 0
      %890 = vmatpush1.bf16.msra.mxu0 %v868
      %891 = vmatprep.subr.bf16.mxu0 0
      %892 = vmatpush1.bf16.msra.mxu0 %v867
      %893 = vmatprep.subr.bf16.mxu0 0
      %894 = vmatpush1.bf16.msra.mxu0 %v866
      %895 = vmatprep.subr.bf16.mxu0 0
      %896 = vmatpush1.bf16.msra.mxu0 %v865
      %897 = vmatprep.subr.bf16.mxu0 0
      %898 = vmatpush2.bf16.msra.mxu0 0
      %899 = vmatprep.subr.bf16.mxu0 0
      %900 = vmatpush2.bf16.msra.mxu0 0
      %901 = vmatprep.subr.bf16.mxu0 0
      %902 = vmatpush2.bf16.msra.mxu0 0
      %903 = vmatprep.subr.bf16.mxu0 0
      %904 = vmatpush2.bf16.msra.mxu0 0
      %905 = vmatprep.subr.bf16.mxu0 0
      %906 = vmatpush2.bf16.msra.mxu0 0
      %907 = vmatprep.subr.bf16.mxu0 0
      %908 = vmatpush2.bf16.msra.mxu0 0
      %909 = vmatprep.subr.bf16.mxu0 0
      %910 = vmatpush2.bf16.msra.mxu0 0
      %911 = vmatprep.subr.bf16.mxu0 0
      %912 = vmatpush2.bf16.msra.mxu0 0
      %913 = vmatprep.mubr.bf16.mxu0 0
      %914 = vmatmul.mubr.bf16.gmra.mxu0 %v819
      %v915 = vpop.f32.mrf.mxu0
      %v916 = vadd.f32 0.0, %v915
      %v917 = vpop.f32.mrf.mxu0
      %v918 = vpop.f32.mrf.mxu0
      %v919 = vadd.f32 0.0, %v918
      %v920 = vpop.f32.mrf.mxu0
      %921 = vmatprep.mubr.bf16.mxu0 0
      %922 = vmatmul.mubr.bf16.gmra.mxu0 %v821
      %v923 = vpop.f32.mrf.mxu0
      %v924 = vadd.f32 0.0, %v923
      %v925 = vpop.f32.mrf.mxu0
      %v926 = vpop.f32.mrf.mxu0
      %v927 = vadd.f32 0.0, %v926
      %v928 = vpop.f32.mrf.mxu0
      %929 = vmatprep.mubr.bf16.mxu0 0
      %930 = vmatmul.mubr.bf16.gmra.mxu0 %v823
      %v931 = vpop.f32.mrf.mxu0
      %v932 = vadd.f32 0.0, %v931
      %v933 = vpop.f32.mrf.mxu0
      %v934 = vpop.f32.mrf.mxu0
      %v935 = vadd.f32 0.0, %v934
      %v936 = vpop.f32.mrf.mxu0
      %937 = vmatprep.mubr.bf16.mxu0 0
      %938 = vmatmul.mubr.bf16.gmra.mxu0 %v825
      %v939 = vpop.f32.mrf.mxu0
      %v940 = vadd.f32 0.0, %v939
      %v941 = vpop.f32.mrf.mxu0
      %v942 = vpop.f32.mrf.mxu0
      %v943 = vadd.f32 0.0, %v942
      %v944 = vpop.f32.mrf.mxu0
      %945 = vmatprep.mubr.bf16.mxu0 0
      %946 = vmatmul.mubr.bf16.gmra.mxu0 %v827
      %v947 = vpop.f32.mrf.mxu0
      %v948 = vadd.f32 0.0, %v947
      %v949 = vpop.f32.mrf.mxu0
      %v950 = vpop.f32.mrf.mxu0
      %v951 = vadd.f32 0.0, %v950
      %v952 = vpop.f32.mrf.mxu0
      %953 = vdwg.mxu0
      %v954 = vadd.f32 %v751, %v916
      %v955 = vadd.f32 %v752, %v919
      %v956 = vadd.f32 %v753, %v924
      %v957 = vadd.f32 %v754, %v927
      %v958 = vadd.f32 %v755, %v932
      %v959 = vadd.f32 %v756, %v935
      %v960 = vadd.f32 %v757, %v940
      %v961 = vadd.f32 %v758, %v943
      %v962 = vadd.f32 %v759, %v948
      %v963 = vadd.f32 %v760, %v951
      %v964 = vld [vmem:[%s206 + $0x2c] sm:$0x3]
      %s965 = scalar_lea.vmem %s210, 256
      %v966 = vld [vmem:[%s965] sm:$0xf]
      %v967 = vld [vmem:[%s965 + $0x4] sm:$0xf]
      %v968 = vld [vmem:[%s965 + $0x8] sm:$0xf]
      %v969 = vld [vmem:[%s965 + $0xc] sm:$0xf]
      %v970 = vld [vmem:[%s965 + $0x10] sm:$0xf]
      %v971 = vld [vmem:[%s965 + $0x14] sm:$0xf]
      %v972 = vld [vmem:[%s965 + $0x18] sm:$0xf]
      %v973 = vld [vmem:[%s965 + $0x1c] sm:$0xf]
      %v974 = vld [vmem:[%s965 + $0x20] sm:$0xf]
      %v975 = vld [vmem:[%s965 + $0x24] sm:$0xf]
      %v976 = vld [vmem:[%s965 + $0x28] sm:$0xf]
      %v977 = vld [vmem:[%s965 + $0x2c] sm:$0xf]
      %v978 = vld [vmem:[%s965 + $0x30] sm:$0xf]
      %v979 = vld [vmem:[%s965 + $0x34] sm:$0xf]
      %v980 = vld [vmem:[%s965 + $0x38] sm:$0xf]
      %v981 = vld [vmem:[%s965 + $0x3c] sm:$0xf]
      %v983 = vunpack.c.l.b16 %v964
      %v984 = vpack.c.b16 %v983, %v983
      %vm985 = vsmask.f32 6400
      %v987 = vshrl.u32 %v811, 16
      %v989 = vrot.slane %v987, 1
      %v990 = vshll.u32 %v811, 16
      %v992 = vrot.slane %v990, 2
      %v993 = vor.u32 %v989, %v992
      %v995 = vshrl.u32 %v812, 16
      %v997 = vrot.slane %v995, 1
      %v998 = vshll.u32 %v812, 16
      %v1000 = vrot.slane %v998, 2
      %v1001 = vor.u32 %v997, %v1000
      %v1002 = vsel %vm985, %v993, %v1001
      %v1004 = vshrl.u32 %v813, 16
      %v1006 = vrot.slane %v1004, 1
      %v1007 = vshll.u32 %v813, 16
      %v1009 = vrot.slane %v1007, 2
      %v1010 = vor.u32 %v1006, %v1009
      %v1011 = vsel %vm985, %v1001, %v1010
      %v1013 = vshrl.u32 %v814, 16
      %v1015 = vrot.slane %v1013, 1
      %v1016 = vshll.u32 %v814, 16
      %v1018 = vrot.slane %v1016, 2
      %v1019 = vor.u32 %v1015, %v1018
      %v1020 = vsel %vm985, %v1010, %v1019
      %v1022 = vshrl.u32 %v815, 16
      %v1024 = vrot.slane %v1022, 1
      %v1025 = vshll.u32 %v815, 16
      %v1027 = vrot.slane %v1025, 2
      %v1028 = vor.u32 %v1024, %v1027
      %v1029 = vsel %vm985, %v1019, %v1028
      %v1031 = vshrl.u32 %v984, 16
      %v1033 = vrot.slane %v1031, 1
      %v1034 = vshll.u32 %v984, 16
      %v1036 = vrot.slane %v1034, 2
      %v1037 = vor.u32 %v1033, %v1036
      %v1038 = vsel %vm985, %v1028, %v1037
      %v1060 = vunpack.c.l.b16 %v966
      %v1061 = vunpack.c.l.b16 %v967
      %v1062 = vunpack.c.l.b16 %v968
      %v1063 = vunpack.c.l.b16 %v969
      %v1064 = vunpack.c.l.b16 %v970
      %v1065 = vunpack.c.l.b16 %v971
      %v1066 = vunpack.c.l.b16 %v972
      %v1067 = vunpack.c.l.b16 %v973
      %v1068 = vunpack.c.l.b16 %v974
      %v1069 = vunpack.c.l.b16 %v975
      %v1070 = vunpack.c.l.b16 %v976
      %v1071 = vunpack.c.l.b16 %v977
      %v1072 = vunpack.c.l.b16 %v978
      %v1073 = vunpack.c.l.b16 %v979
      %v1074 = vunpack.c.l.b16 %v980
      %v1075 = vunpack.c.l.b16 %v981
      %v1076 = vpack.c.b16 %v1061, %v1060
      %v1077 = vpack.c.b16 %v1063, %v1062
      %v1078 = vpack.c.b16 %v1065, %v1064
      %v1079 = vpack.c.b16 %v1067, %v1066
      %v1080 = vpack.c.b16 %v1069, %v1068
      %v1081 = vpack.c.b16 %v1071, %v1070
      %v1082 = vpack.c.b16 %v1073, %v1072
      %v1083 = vpack.c.b16 %v1075, %v1074
      %1092 = vmatprep.subr.bf16.mxu0 0
      %1093 = vmatpush1.bf16.msra.mxu0 %v1083
      %1094 = vmatprep.subr.bf16.mxu0 0
      %1095 = vmatpush1.bf16.msra.mxu0 %v1082
      %1096 = vmatprep.subr.bf16.mxu0 0
      %1097 = vmatpush1.bf16.msra.mxu0 %v1081
      %1098 = vmatprep.subr.bf16.mxu0 0
      %1099 = vmatpush1.bf16.msra.mxu0 %v1080
      %1100 = vmatprep.subr.bf16.mxu0 0
      %1101 = vmatpush1.bf16.msra.mxu0 %v1079
      %1102 = vmatprep.subr.bf16.mxu0 0
      %1103 = vmatpush1.bf16.msra.mxu0 %v1078
      %1104 = vmatprep.subr.bf16.mxu0 0
      %1105 = vmatpush1.bf16.msra.mxu0 %v1077
      %1106 = vmatprep.subr.bf16.mxu0 0
      %1107 = vmatpush1.bf16.msra.mxu0 %v1076
      %1108 = vmatprep.subr.bf16.mxu0 0
      %1109 = vmatpush2.bf16.msra.mxu0 0
      %1110 = vmatprep.subr.bf16.mxu0 0
      %1111 = vmatpush2.bf16.msra.mxu0 0
      %1112 = vmatprep.subr.bf16.mxu0 0
      %1113 = vmatpush2.bf16.msra.mxu0 0
      %1114 = vmatprep.subr.bf16.mxu0 0
      %1115 = vmatpush2.bf16.msra.mxu0 0
      %1116 = vmatprep.subr.bf16.mxu0 0
      %1117 = vmatpush2.bf16.msra.mxu0 0
      %1118 = vmatprep.subr.bf16.mxu0 0
      %1119 = vmatpush2.bf16.msra.mxu0 0
      %1120 = vmatprep.subr.bf16.mxu0 0
      %1121 = vmatpush2.bf16.msra.mxu0 0
      %1122 = vmatprep.subr.bf16.mxu0 0
      %1123 = vmatpush2.bf16.msra.mxu0 0
      %1124 = vmatprep.mubr.bf16.mxu0 0
      %1125 = vmatmul.mubr.bf16.gmra.mxu0 %v1002
      %v1126 = vpop.f32.mrf.mxu0
      %v1127 = vadd.f32 0.0, %v1126
      %v1128 = vpop.f32.mrf.mxu0
      %v1129 = vpop.f32.mrf.mxu0
      %v1130 = vadd.f32 0.0, %v1129
      %v1131 = vpop.f32.mrf.mxu0
      %1132 = vmatprep.mubr.bf16.mxu0 0
      %1133 = vmatmul.mubr.bf16.gmra.mxu0 %v1011
      %v1134 = vpop.f32.mrf.mxu0
      %v1135 = vadd.f32 0.0, %v1134
      %v1136 = vpop.f32.mrf.mxu0
      %v1137 = vpop.f32.mrf.mxu0
      %v1138 = vadd.f32 0.0, %v1137
      %v1139 = vpop.f32.mrf.mxu0
      %1140 = vmatprep.mubr.bf16.mxu0 0
      %1141 = vmatmul.mubr.bf16.gmra.mxu0 %v1020
      %v1142 = vpop.f32.mrf.mxu0
      %v1143 = vadd.f32 0.0, %v1142
      %v1144 = vpop.f32.mrf.mxu0
      %v1145 = vpop.f32.mrf.mxu0
      %v1146 = vadd.f32 0.0, %v1145
      %v1147 = vpop.f32.mrf.mxu0
      %1148 = vmatprep.mubr.bf16.mxu0 0
      %1149 = vmatmul.mubr.bf16.gmra.mxu0 %v1029
      %v1150 = vpop.f32.mrf.mxu0
      %v1151 = vadd.f32 0.0, %v1150
      %v1152 = vpop.f32.mrf.mxu0
      %v1153 = vpop.f32.mrf.mxu0
      %v1154 = vadd.f32 0.0, %v1153
      %v1155 = vpop.f32.mrf.mxu0
      %1156 = vmatprep.mubr.bf16.mxu0 0
      %1157 = vmatmul.mubr.bf16.gmra.mxu0 %v1038
      %v1158 = vpop.f32.mrf.mxu0
      %v1159 = vadd.f32 0.0, %v1158
      %v1160 = vpop.f32.mrf.mxu0
      %v1161 = vpop.f32.mrf.mxu0
      %v1162 = vadd.f32 0.0, %v1161
      %v1163 = vpop.f32.mrf.mxu0
      %1164 = vdwg.mxu0
      %v1165 = vadd.f32 %v954, %v1127
      %v1166 = vadd.f32 %v955, %v1130
      %v1167 = vadd.f32 %v956, %v1135
      %v1168 = vadd.f32 %v957, %v1138
      %v1169 = vadd.f32 %v958, %v1143
      %v1170 = vadd.f32 %v959, %v1146
      %v1171 = vadd.f32 %v960, %v1151
      %v1172 = vadd.f32 %v961, %v1154
      %v1173 = vadd.f32 %v962, %v1159
      %v1174 = vadd.f32 %v963, %v1162
      %v1175 = vld [vmem:[%s206 + $0x4] sm:$0xc]
      %s1176 = scalar_lea.vmem %s210, 320
      %v1177 = vld [vmem:[%s1176] sm:$0xf]
      %v1178 = vld [vmem:[%s1176 + $0x4] sm:$0xf]
      %v1179 = vld [vmem:[%s1176 + $0x8] sm:$0xf]
      %v1180 = vld [vmem:[%s1176 + $0xc] sm:$0xf]
      %v1181 = vld [vmem:[%s1176 + $0x10] sm:$0xf]
      %v1182 = vld [vmem:[%s1176 + $0x14] sm:$0xf]
      %v1183 = vld [vmem:[%s1176 + $0x18] sm:$0xf]
      %v1184 = vld [vmem:[%s1176 + $0x1c] sm:$0xf]
      %v1185 = vld [vmem:[%s1176 + $0x20] sm:$0xf]
      %v1186 = vld [vmem:[%s1176 + $0x24] sm:$0xf]
      %v1187 = vld [vmem:[%s1176 + $0x28] sm:$0xf]
      %v1188 = vld [vmem:[%s1176 + $0x2c] sm:$0xf]
      %v1189 = vld [vmem:[%s1176 + $0x30] sm:$0xf]
      %v1190 = vld [vmem:[%s1176 + $0x34] sm:$0xf]
      %v1191 = vld [vmem:[%s1176 + $0x38] sm:$0xf]
      %v1192 = vld [vmem:[%s1176 + $0x3c] sm:$0xf]
      %v1194 = vunpack.c.l.b16 %v1175
      %v1195 = vpack.c.b16 %v801, %v1194
      %vm1196 = vcmask 1045504
      %v1197 = vrot.slane %v1195, 2
      %v1198 = vrot.slane %v812, 2
      %v1199 = vsel %vm1196, %v1197, %v1198
      %v1200 = vrot.slane %v813, 2
      %v1201 = vsel %vm1196, %v1198, %v1200
      %v1202 = vrot.slane %v814, 2
      %v1203 = vsel %vm1196, %v1200, %v1202
      %v1204 = vrot.slane %v815, 2
      %v1205 = vsel %vm1196, %v1202, %v1204
      %v1206 = vrot.slane %v984, 2
      %v1207 = vsel %vm1196, %v1204, %v1206
      %v1229 = vunpack.c.l.b16 %v1177
      %v1230 = vunpack.c.l.b16 %v1178
      %v1231 = vunpack.c.l.b16 %v1179
      %v1232 = vunpack.c.l.b16 %v1180
      %v1233 = vunpack.c.l.b16 %v1181
      %v1234 = vunpack.c.l.b16 %v1182
      %v1235 = vunpack.c.l.b16 %v1183
      %v1236 = vunpack.c.l.b16 %v1184
      %v1237 = vunpack.c.l.b16 %v1185
      %v1238 = vunpack.c.l.b16 %v1186
      %v1239 = vunpack.c.l.b16 %v1187
      %v1240 = vunpack.c.l.b16 %v1188
      %v1241 = vunpack.c.l.b16 %v1189
      %v1242 = vunpack.c.l.b16 %v1190
      %v1243 = vunpack.c.l.b16 %v1191
      %v1244 = vunpack.c.l.b16 %v1192
      %v1245 = vpack.c.b16 %v1230, %v1229
      %v1246 = vpack.c.b16 %v1232, %v1231
      %v1247 = vpack.c.b16 %v1234, %v1233
      %v1248 = vpack.c.b16 %v1236, %v1235
      %v1249 = vpack.c.b16 %v1238, %v1237
      %v1250 = vpack.c.b16 %v1240, %v1239
      %v1251 = vpack.c.b16 %v1242, %v1241
      %v1252 = vpack.c.b16 %v1244, %v1243
      %1261 = vmatprep.subr.bf16.mxu0 0
      %1262 = vmatpush1.bf16.msra.mxu0 %v1252
      %1263 = vmatprep.subr.bf16.mxu0 0
      %1264 = vmatpush1.bf16.msra.mxu0 %v1251
      %1265 = vmatprep.subr.bf16.mxu0 0
      %1266 = vmatpush1.bf16.msra.mxu0 %v1250
      %1267 = vmatprep.subr.bf16.mxu0 0
      %1268 = vmatpush1.bf16.msra.mxu0 %v1249
      %1269 = vmatprep.subr.bf16.mxu0 0
      %1270 = vmatpush1.bf16.msra.mxu0 %v1248
      %1271 = vmatprep.subr.bf16.mxu0 0
      %1272 = vmatpush1.bf16.msra.mxu0 %v1247
      %1273 = vmatprep.subr.bf16.mxu0 0
      %1274 = vmatpush1.bf16.msra.mxu0 %v1246
      %1275 = vmatprep.subr.bf16.mxu0 0
      %1276 = vmatpush1.bf16.msra.mxu0 %v1245
      %1277 = vmatprep.subr.bf16.mxu0 0
      %1278 = vmatpush2.bf16.msra.mxu0 0
      %1279 = vmatprep.subr.bf16.mxu0 0
      %1280 = vmatpush2.bf16.msra.mxu0 0
      %1281 = vmatprep.subr.bf16.mxu0 0
      %1282 = vmatpush2.bf16.msra.mxu0 0
      %1283 = vmatprep.subr.bf16.mxu0 0
      %1284 = vmatpush2.bf16.msra.mxu0 0
      %1285 = vmatprep.subr.bf16.mxu0 0
      %1286 = vmatpush2.bf16.msra.mxu0 0
      %1287 = vmatprep.subr.bf16.mxu0 0
      %1288 = vmatpush2.bf16.msra.mxu0 0
      %1289 = vmatprep.subr.bf16.mxu0 0
      %1290 = vmatpush2.bf16.msra.mxu0 0
      %1291 = vmatprep.subr.bf16.mxu0 0
      %1292 = vmatpush2.bf16.msra.mxu0 0
      %1293 = vmatprep.mubr.bf16.mxu0 0
      %1294 = vmatmul.mubr.bf16.gmra.mxu0 %v1199
      %v1295 = vpop.f32.mrf.mxu0
      %v1296 = vadd.f32 0.0, %v1295
      %v1297 = vpop.f32.mrf.mxu0
      %v1298 = vpop.f32.mrf.mxu0
      %v1299 = vadd.f32 0.0, %v1298
      %v1300 = vpop.f32.mrf.mxu0
      %1301 = vmatprep.mubr.bf16.mxu0 0
      %1302 = vmatmul.mubr.bf16.gmra.mxu0 %v1201
      %v1303 = vpop.f32.mrf.mxu0
      %v1304 = vadd.f32 0.0, %v1303
      %v1305 = vpop.f32.mrf.mxu0
      %v1306 = vpop.f32.mrf.mxu0
      %v1307 = vadd.f32 0.0, %v1306
      %v1308 = vpop.f32.mrf.mxu0
      %1309 = vmatprep.mubr.bf16.mxu0 0
      %1310 = vmatmul.mubr.bf16.gmra.mxu0 %v1203
      %v1311 = vpop.f32.mrf.mxu0
      %v1312 = vadd.f32 0.0, %v1311
      %v1313 = vpop.f32.mrf.mxu0
      %v1314 = vpop.f32.mrf.mxu0
      %v1315 = vadd.f32 0.0, %v1314
      %v1316 = vpop.f32.mrf.mxu0
      %1317 = vmatprep.mubr.bf16.mxu0 0
      %1318 = vmatmul.mubr.bf16.gmra.mxu0 %v1205
      %v1319 = vpop.f32.mrf.mxu0
      %v1320 = vadd.f32 0.0, %v1319
      %v1321 = vpop.f32.mrf.mxu0
      %v1322 = vpop.f32.mrf.mxu0
      %v1323 = vadd.f32 0.0, %v1322
      %v1324 = vpop.f32.mrf.mxu0
      %1325 = vmatprep.mubr.bf16.mxu0 0
      %1326 = vmatmul.mubr.bf16.gmra.mxu0 %v1207
      %v1327 = vpop.f32.mrf.mxu0
      %v1328 = vadd.f32 0.0, %v1327
      %v1329 = vpop.f32.mrf.mxu0
      %v1330 = vpop.f32.mrf.mxu0
      %v1331 = vadd.f32 0.0, %v1330
      %v1332 = vpop.f32.mrf.mxu0
      %1333 = vdwg.mxu0
      %v1334 = vadd.f32 %v1165, %v1296
      %v1335 = vadd.f32 %v1166, %v1299
      %v1336 = vadd.f32 %v1167, %v1304
      %v1337 = vadd.f32 %v1168, %v1307
      %v1338 = vadd.f32 %v1169, %v1312
      %v1339 = vadd.f32 %v1170, %v1315
      %v1340 = vadd.f32 %v1171, %v1320
      %v1341 = vadd.f32 %v1172, %v1323
      %v1342 = vadd.f32 %v1173, %v1328
      %v1343 = vadd.f32 %v1174, %v1331
      %v1344 = vld [vmem:[%s206 + $0x8] sm:$0xc]
      %v1345 = vld [vmem:[%s206 + $0xc] sm:$0xf]
      %v1346 = vld [vmem:[%s206 + $0x10] sm:$0xf]
      %v1347 = vld [vmem:[%s206 + $0x14] sm:$0xf]
      %v1348 = vld [vmem:[%s206 + $0x18] sm:$0xf]
      %v1349 = vld [vmem:[%s206 + $0x1c] sm:$0xf]
      %v1350 = vld [vmem:[%s206 + $0x20] sm:$0xf]
      %v1351 = vld [vmem:[%s206 + $0x24] sm:$0xf]
      %v1352 = vld [vmem:[%s206 + $0x28] sm:$0xf]
      %v1353 = vld [vmem:[%s206 + $0x2c] sm:$0xf]
      %v1354 = vld [vmem:[%s206 + $0x30] sm:$0x3]
      %s1355 = scalar_lea.vmem %s210, 384
      %v1356 = vld [vmem:[%s1355] sm:$0xf]
      %v1357 = vld [vmem:[%s1355 + $0x4] sm:$0xf]
      %v1358 = vld [vmem:[%s1355 + $0x8] sm:$0xf]
      %v1359 = vld [vmem:[%s1355 + $0xc] sm:$0xf]
      %v1360 = vld [vmem:[%s1355 + $0x10] sm:$0xf]
      %v1361 = vld [vmem:[%s1355 + $0x14] sm:$0xf]
      %v1362 = vld [vmem:[%s1355 + $0x18] sm:$0xf]
      %v1363 = vld [vmem:[%s1355 + $0x1c] sm:$0xf]
      %v1364 = vld [vmem:[%s1355 + $0x20] sm:$0xf]
      %v1365 = vld [vmem:[%s1355 + $0x24] sm:$0xf]
      %v1366 = vld [vmem:[%s1355 + $0x28] sm:$0xf]
      %v1367 = vld [vmem:[%s1355 + $0x2c] sm:$0xf]
      %v1368 = vld [vmem:[%s1355 + $0x30] sm:$0xf]
      %v1369 = vld [vmem:[%s1355 + $0x34] sm:$0xf]
      %v1370 = vld [vmem:[%s1355 + $0x38] sm:$0xf]
      %v1371 = vld [vmem:[%s1355 + $0x3c] sm:$0xf]
      %v1383 = vunpack.c.l.b16 %v1344
      %v1384 = vunpack.c.l.b16 %v1345
      %v1385 = vunpack.c.l.b16 %v1346
      %v1386 = vunpack.c.l.b16 %v1347
      %v1387 = vunpack.c.l.b16 %v1348
      %v1388 = vunpack.c.l.b16 %v1349
      %v1389 = vunpack.c.l.b16 %v1350
      %v1390 = vunpack.c.l.b16 %v1351
      %v1391 = vunpack.c.l.b16 %v1352
      %v1392 = vunpack.c.l.b16 %v1353
      %v1393 = vunpack.c.l.b16 %v1354
      %v1394 = vpack.c.b16 %v1384, %v1383
      %v1395 = vpack.c.b16 %v1386, %v1385
      %v1396 = vpack.c.b16 %v1388, %v1387
      %v1397 = vpack.c.b16 %v1390, %v1389
      %v1398 = vpack.c.b16 %v1392, %v1391
      %v1399 = vpack.c.b16 %v1393, %v1393
      %v1400 = vrot.slane %v1394, 2
      %v1401 = vrot.slane %v1395, 2
      %v1402 = vsel %vm1196, %v1400, %v1401
      %v1403 = vrot.slane %v1396, 2
      %v1404 = vsel %vm1196, %v1401, %v1403
      %v1405 = vrot.slane %v1397, 2
      %v1406 = vsel %vm1196, %v1403, %v1405
      %v1407 = vrot.slane %v1398, 2
      %v1408 = vsel %vm1196, %v1405, %v1407
      %v1409 = vrot.slane %v1399, 2
      %v1410 = vsel %vm1196, %v1407, %v1409
      %v1432 = vunpack.c.l.b16 %v1356
      %v1433 = vunpack.c.l.b16 %v1357
      %v1434 = vunpack.c.l.b16 %v1358
      %v1435 = vunpack.c.l.b16 %v1359
      %v1436 = vunpack.c.l.b16 %v1360
      %v1437 = vunpack.c.l.b16 %v1361
      %v1438 = vunpack.c.l.b16 %v1362
      %v1439 = vunpack.c.l.b16 %v1363
      %v1440 = vunpack.c.l.b16 %v1364
      %v1441 = vunpack.c.l.b16 %v1365
      %v1442 = vunpack.c.l.b16 %v1366
      %v1443 = vunpack.c.l.b16 %v1367
      %v1444 = vunpack.c.l.b16 %v1368
      %v1445 = vunpack.c.l.b16 %v1369
      %v1446 = vunpack.c.l.b16 %v1370
      %v1447 = vunpack.c.l.b16 %v1371
      %v1448 = vpack.c.b16 %v1433, %v1432
      %v1449 = vpack.c.b16 %v1435, %v1434
      %v1450 = vpack.c.b16 %v1437, %v1436
      %v1451 = vpack.c.b16 %v1439, %v1438
      %v1452 = vpack.c.b16 %v1441, %v1440
      %v1453 = vpack.c.b16 %v1443, %v1442
      %v1454 = vpack.c.b16 %v1445, %v1444
      %v1455 = vpack.c.b16 %v1447, %v1446
      %1464 = vmatprep.subr.bf16.mxu0 0
      %1465 = vmatpush1.bf16.msra.mxu0 %v1455
      %1466 = vmatprep.subr.bf16.mxu0 0
      %1467 = vmatpush1.bf16.msra.mxu0 %v1454
      %1468 = vmatprep.subr.bf16.mxu0 0
      %1469 = vmatpush1.bf16.msra.mxu0 %v1453
      %1470 = vmatprep.subr.bf16.mxu0 0
      %1471 = vmatpush1.bf16.msra.mxu0 %v1452
      %1472 = vmatprep.subr.bf16.mxu0 0
      %1473 = vmatpush1.bf16.msra.mxu0 %v1451
      %1474 = vmatprep.subr.bf16.mxu0 0
      %1475 = vmatpush1.bf16.msra.mxu0 %v1450
      %1476 = vmatprep.subr.bf16.mxu0 0
      %1477 = vmatpush1.bf16.msra.mxu0 %v1449
      %1478 = vmatprep.subr.bf16.mxu0 0
      %1479 = vmatpush1.bf16.msra.mxu0 %v1448
      %1480 = vmatprep.subr.bf16.mxu0 0
      %1481 = vmatpush2.bf16.msra.mxu0 0
      %1482 = vmatprep.subr.bf16.mxu0 0
      %1483 = vmatpush2.bf16.msra.mxu0 0
      %1484 = vmatprep.subr.bf16.mxu0 0
      %1485 = vmatpush2.bf16.msra.mxu0 0
      %1486 = vmatprep.subr.bf16.mxu0 0
      %1487 = vmatpush2.bf16.msra.mxu0 0
      %1488 = vmatprep.subr.bf16.mxu0 0
      %1489 = vmatpush2.bf16.msra.mxu0 0
      %1490 = vmatprep.subr.bf16.mxu0 0
      %1491 = vmatpush2.bf16.msra.mxu0 0
      %1492 = vmatprep.subr.bf16.mxu0 0
      %1493 = vmatpush2.bf16.msra.mxu0 0
      %1494 = vmatprep.subr.bf16.mxu0 0
      %1495 = vmatpush2.bf16.msra.mxu0 0
      %1496 = vmatprep.mubr.bf16.mxu0 0
      %1497 = vmatmul.mubr.bf16.gmra.mxu0 %v1402
      %v1498 = vpop.f32.mrf.mxu0
      %v1499 = vadd.f32 0.0, %v1498
      %v1500 = vpop.f32.mrf.mxu0
      %v1501 = vpop.f32.mrf.mxu0
      %v1502 = vadd.f32 0.0, %v1501
      %v1503 = vpop.f32.mrf.mxu0
      %1504 = vmatprep.mubr.bf16.mxu0 0
      %1505 = vmatmul.mubr.bf16.gmra.mxu0 %v1404
      %v1506 = vpop.f32.mrf.mxu0
      %v1507 = vadd.f32 0.0, %v1506
      %v1508 = vpop.f32.mrf.mxu0
      %v1509 = vpop.f32.mrf.mxu0
      %v1510 = vadd.f32 0.0, %v1509
      %v1511 = vpop.f32.mrf.mxu0
      %1512 = vmatprep.mubr.bf16.mxu0 0
      %1513 = vmatmul.mubr.bf16.gmra.mxu0 %v1406
      %v1514 = vpop.f32.mrf.mxu0
      %v1515 = vadd.f32 0.0, %v1514
      %v1516 = vpop.f32.mrf.mxu0
      %v1517 = vpop.f32.mrf.mxu0
      %v1518 = vadd.f32 0.0, %v1517
      %v1519 = vpop.f32.mrf.mxu0
      %1520 = vmatprep.mubr.bf16.mxu0 0
      %1521 = vmatmul.mubr.bf16.gmra.mxu0 %v1408
      %v1522 = vpop.f32.mrf.mxu0
      %v1523 = vadd.f32 0.0, %v1522
      %v1524 = vpop.f32.mrf.mxu0
      %v1525 = vpop.f32.mrf.mxu0
      %v1526 = vadd.f32 0.0, %v1525
      %v1527 = vpop.f32.mrf.mxu0
      %1528 = vmatprep.mubr.bf16.mxu0 0
      %1529 = vmatmul.mubr.bf16.gmra.mxu0 %v1410
      %v1530 = vpop.f32.mrf.mxu0
      %v1531 = vadd.f32 0.0, %v1530
      %v1532 = vpop.f32.mrf.mxu0
      %v1533 = vpop.f32.mrf.mxu0
      %v1534 = vadd.f32 0.0, %v1533
      %v1535 = vpop.f32.mrf.mxu0
      %1536 = vdwg.mxu0
      %v1537 = vadd.f32 %v1334, %v1499
      %v1538 = vadd.f32 %v1335, %v1502
      %v1539 = vadd.f32 %v1336, %v1507
      %v1540 = vadd.f32 %v1337, %v1510
      %v1541 = vadd.f32 %v1338, %v1515
      %v1542 = vadd.f32 %v1339, %v1518
      %v1543 = vadd.f32 %v1340, %v1523
      %v1544 = vadd.f32 %v1341, %v1526
      %v1545 = vadd.f32 %v1342, %v1531
      %v1546 = vadd.f32 %v1343, %v1534
      %v1547 = vld [vmem:[%s206 + $0x30] sm:$0x7]
      %s1548 = scalar_lea.vmem %s210, 448
      %v1549 = vld [vmem:[%s1548] sm:$0xf]
      %v1550 = vld [vmem:[%s1548 + $0x4] sm:$0xf]
      %v1551 = vld [vmem:[%s1548 + $0x8] sm:$0xf]
      %v1552 = vld [vmem:[%s1548 + $0xc] sm:$0xf]
      %v1553 = vld [vmem:[%s1548 + $0x10] sm:$0xf]
      %v1554 = vld [vmem:[%s1548 + $0x14] sm:$0xf]
      %v1555 = vld [vmem:[%s1548 + $0x18] sm:$0xf]
      %v1556 = vld [vmem:[%s1548 + $0x1c] sm:$0xf]
      %v1557 = vld [vmem:[%s1548 + $0x20] sm:$0xf]
      %v1558 = vld [vmem:[%s1548 + $0x24] sm:$0xf]
      %v1559 = vld [vmem:[%s1548 + $0x28] sm:$0xf]
      %v1560 = vld [vmem:[%s1548 + $0x2c] sm:$0xf]
      %v1561 = vld [vmem:[%s1548 + $0x30] sm:$0xf]
      %v1562 = vld [vmem:[%s1548 + $0x34] sm:$0xf]
      %v1563 = vld [vmem:[%s1548 + $0x38] sm:$0xf]
      %v1564 = vld [vmem:[%s1548 + $0x3c] sm:$0xf]
      %v1566 = vunpack.c.l.b16 %v1547
      %v1567 = vpack.c.b16 %v1566, %v1566
      %vm1568 = vsmask.f32 5376
      %v1570 = vshrl.u32 %v1394, 16
      %v1572 = vrot.slane %v1570, 2
      %v1573 = vshll.u32 %v1394, 16
      %v1575 = vrot.slane %v1573, 3
      %v1576 = vor.u32 %v1572, %v1575
      %v1578 = vshrl.u32 %v1395, 16
      %v1580 = vrot.slane %v1578, 2
      %v1581 = vshll.u32 %v1395, 16
      %v1583 = vrot.slane %v1581, 3
      %v1584 = vor.u32 %v1580, %v1583
      %v1585 = vsel %vm1568, %v1576, %v1584
      %v1587 = vshrl.u32 %v1396, 16
      %v1589 = vrot.slane %v1587, 2
      %v1590 = vshll.u32 %v1396, 16
      %v1592 = vrot.slane %v1590, 3
      %v1593 = vor.u32 %v1589, %v1592
      %v1594 = vsel %vm1568, %v1584, %v1593
      %v1596 = vshrl.u32 %v1397, 16
      %v1598 = vrot.slane %v1596, 2
      %v1599 = vshll.u32 %v1397, 16
      %v1601 = vrot.slane %v1599, 3
      %v1602 = vor.u32 %v1598, %v1601
      %v1603 = vsel %vm1568, %v1593, %v1602
      %v1605 = vshrl.u32 %v1398, 16
      %v1607 = vrot.slane %v1605, 2
      %v1608 = vshll.u32 %v1398, 16
      %v1610 = vrot.slane %v1608, 3
      %v1611 = vor.u32 %v1607, %v1610
      %v1612 = vsel %vm1568, %v1602, %v1611
      %v1614 = vshrl.u32 %v1567, 16
      %v1616 = vrot.slane %v1614, 2
      %v1617 = vshll.u32 %v1567, 16
      %v1619 = vrot.slane %v1617, 3
      %v1620 = vor.u32 %v1616, %v1619
      %v1621 = vsel %vm1568, %v1611, %v1620
      %v1643 = vunpack.c.l.b16 %v1549
      %v1644 = vunpack.c.l.b16 %v1550
      %v1645 = vunpack.c.l.b16 %v1551
      %v1646 = vunpack.c.l.b16 %v1552
      %v1647 = vunpack.c.l.b16 %v1553
      %v1648 = vunpack.c.l.b16 %v1554
      %v1649 = vunpack.c.l.b16 %v1555
      %v1650 = vunpack.c.l.b16 %v1556
      %v1651 = vunpack.c.l.b16 %v1557
      %v1652 = vunpack.c.l.b16 %v1558
      %v1653 = vunpack.c.l.b16 %v1559
      %v1654 = vunpack.c.l.b16 %v1560
      %v1655 = vunpack.c.l.b16 %v1561
      %v1656 = vunpack.c.l.b16 %v1562
      %v1657 = vunpack.c.l.b16 %v1563
      %v1658 = vunpack.c.l.b16 %v1564
      %v1659 = vpack.c.b16 %v1644, %v1643
      %v1660 = vpack.c.b16 %v1646, %v1645
      %v1661 = vpack.c.b16 %v1648, %v1647
      %v1662 = vpack.c.b16 %v1650, %v1649
      %v1663 = vpack.c.b16 %v1652, %v1651
      %v1664 = vpack.c.b16 %v1654, %v1653
      %v1665 = vpack.c.b16 %v1656, %v1655
      %v1666 = vpack.c.b16 %v1658, %v1657
      %1675 = vmatprep.subr.bf16.mxu0 0
      %1676 = vmatpush1.bf16.msra.mxu0 %v1666
      %1677 = vmatprep.subr.bf16.mxu0 0
      %1678 = vmatpush1.bf16.msra.mxu0 %v1665
      %1679 = vmatprep.subr.bf16.mxu0 0
      %1680 = vmatpush1.bf16.msra.mxu0 %v1664
      %1681 = vmatprep.subr.bf16.mxu0 0
      %1682 = vmatpush1.bf16.msra.mxu0 %v1663
      %1683 = vmatprep.subr.bf16.mxu0 0
      %1684 = vmatpush1.bf16.msra.mxu0 %v1662
      %1685 = vmatprep.subr.bf16.mxu0 0
      %1686 = vmatpush1.bf16.msra.mxu0 %v1661
      %1687 = vmatprep.subr.bf16.mxu0 0
      %1688 = vmatpush1.bf16.msra.mxu0 %v1660
      %1689 = vmatprep.subr.bf16.mxu0 0
      %1690 = vmatpush1.bf16.msra.mxu0 %v1659
      %1691 = vmatprep.subr.bf16.mxu0 0
      %1692 = vmatpush2.bf16.msra.mxu0 0
      %1693 = vmatprep.subr.bf16.mxu0 0
      %1694 = vmatpush2.bf16.msra.mxu0 0
      %1695 = vmatprep.subr.bf16.mxu0 0
      %1696 = vmatpush2.bf16.msra.mxu0 0
      %1697 = vmatprep.subr.bf16.mxu0 0
      %1698 = vmatpush2.bf16.msra.mxu0 0
      %1699 = vmatprep.subr.bf16.mxu0 0
      %1700 = vmatpush2.bf16.msra.mxu0 0
      %1701 = vmatprep.subr.bf16.mxu0 0
      %1702 = vmatpush2.bf16.msra.mxu0 0
      %1703 = vmatprep.subr.bf16.mxu0 0
      %1704 = vmatpush2.bf16.msra.mxu0 0
      %1705 = vmatprep.subr.bf16.mxu0 0
      %1706 = vmatpush2.bf16.msra.mxu0 0
      %1707 = vmatprep.mubr.bf16.mxu0 0
      %1708 = vmatmul.mubr.bf16.gmra.mxu0 %v1585
      %v1709 = vpop.f32.mrf.mxu0
      %v1710 = vadd.f32 0.0, %v1709
      %v1711 = vpop.f32.mrf.mxu0
      %v1712 = vpop.f32.mrf.mxu0
      %v1713 = vadd.f32 0.0, %v1712
      %v1714 = vpop.f32.mrf.mxu0
      %1715 = vmatprep.mubr.bf16.mxu0 0
      %1716 = vmatmul.mubr.bf16.gmra.mxu0 %v1594
      %v1717 = vpop.f32.mrf.mxu0
      %v1718 = vadd.f32 0.0, %v1717
      %v1719 = vpop.f32.mrf.mxu0
      %v1720 = vpop.f32.mrf.mxu0
      %v1721 = vadd.f32 0.0, %v1720
      %v1722 = vpop.f32.mrf.mxu0
      %1723 = vmatprep.mubr.bf16.mxu0 0
      %1724 = vmatmul.mubr.bf16.gmra.mxu0 %v1603
      %v1725 = vpop.f32.mrf.mxu0
      %v1726 = vadd.f32 0.0, %v1725
      %v1727 = vpop.f32.mrf.mxu0
      %v1728 = vpop.f32.mrf.mxu0
      %v1729 = vadd.f32 0.0, %v1728
      %v1730 = vpop.f32.mrf.mxu0
      %1731 = vmatprep.mubr.bf16.mxu0 0
      %1732 = vmatmul.mubr.bf16.gmra.mxu0 %v1612
      %v1733 = vpop.f32.mrf.mxu0
      %v1734 = vadd.f32 0.0, %v1733
      %v1735 = vpop.f32.mrf.mxu0
      %v1736 = vpop.f32.mrf.mxu0
      %v1737 = vadd.f32 0.0, %v1736
      %v1738 = vpop.f32.mrf.mxu0
      %1739 = vmatprep.mubr.bf16.mxu0 0
      %1740 = vmatmul.mubr.bf16.gmra.mxu0 %v1621
      %v1741 = vpop.f32.mrf.mxu0
      %v1742 = vadd.f32 0.0, %v1741
      %v1743 = vpop.f32.mrf.mxu0
      %v1744 = vpop.f32.mrf.mxu0
      %v1745 = vadd.f32 0.0, %v1744
      %v1746 = vpop.f32.mrf.mxu0
      %1747 = vdwg.mxu0
      %v1748 = vadd.f32 %v1537, %v1710
      %v1749 = vadd.f32 %v1538, %v1713
      %v1750 = vadd.f32 %v1539, %v1718
      %v1751 = vadd.f32 %v1540, %v1721
      %v1752 = vadd.f32 %v1541, %v1726
      %v1753 = vadd.f32 %v1542, %v1729
      %v1754 = vadd.f32 %v1543, %v1734
      %v1755 = vadd.f32 %v1544, %v1737
      %v1756 = vadd.f32 %v1545, %v1742
      %v1757 = vadd.f32 %v1546, %v1745
      %v1758 = vld [vmem:[%s206 + $0x8] sm:$0x8]
      %s1759 = scalar_lea.vmem %s210, 512
      %v1760 = vld [vmem:[%s1759] sm:$0xf]
      %v1761 = vld [vmem:[%s1759 + $0x4] sm:$0xf]
      %v1762 = vld [vmem:[%s1759 + $0x8] sm:$0xf]
      %v1763 = vld [vmem:[%s1759 + $0xc] sm:$0xf]
      %v1764 = vld [vmem:[%s1759 + $0x10] sm:$0xf]
      %v1765 = vld [vmem:[%s1759 + $0x14] sm:$0xf]
      %v1766 = vld [vmem:[%s1759 + $0x18] sm:$0xf]
      %v1767 = vld [vmem:[%s1759 + $0x1c] sm:$0xf]
      %v1768 = vld [vmem:[%s1759 + $0x20] sm:$0xf]
      %v1769 = vld [vmem:[%s1759 + $0x24] sm:$0xf]
      %v1770 = vld [vmem:[%s1759 + $0x28] sm:$0xf]
      %v1771 = vld [vmem:[%s1759 + $0x2c] sm:$0xf]
      %v1772 = vld [vmem:[%s1759 + $0x30] sm:$0xf]
      %v1773 = vld [vmem:[%s1759 + $0x34] sm:$0xf]
      %v1774 = vld [vmem:[%s1759 + $0x38] sm:$0xf]
      %v1775 = vld [vmem:[%s1759 + $0x3c] sm:$0xf]
      %v1777 = vunpack.c.l.b16 %v1758
      %v1778 = vpack.c.b16 %v1384, %v1777
      %vm1779 = vcmask 1044480
      %v1780 = vrot.slane %v1778, 3
      %v1781 = vrot.slane %v1395, 3
      %v1782 = vsel %vm1779, %v1780, %v1781
      %v1783 = vrot.slane %v1396, 3
      %v1784 = vsel %vm1779, %v1781, %v1783
      %v1785 = vrot.slane %v1397, 3
      %v1786 = vsel %vm1779, %v1783, %v1785
      %v1787 = vrot.slane %v1398, 3
      %v1788 = vsel %vm1779, %v1785, %v1787
      %v1789 = vrot.slane %v1567, 3
      %v1790 = vsel %vm1779, %v1787, %v1789
      %v1812 = vunpack.c.l.b16 %v1760
      %v1813 = vunpack.c.l.b16 %v1761
      %v1814 = vunpack.c.l.b16 %v1762
      %v1815 = vunpack.c.l.b16 %v1763
      %v1816 = vunpack.c.l.b16 %v1764
      %v1817 = vunpack.c.l.b16 %v1765
      %v1818 = vunpack.c.l.b16 %v1766
      %v1819 = vunpack.c.l.b16 %v1767
      %v1820 = vunpack.c.l.b16 %v1768
      %v1821 = vunpack.c.l.b16 %v1769
      %v1822 = vunpack.c.l.b16 %v1770
      %v1823 = vunpack.c.l.b16 %v1771
      %v1824 = vunpack.c.l.b16 %v1772
      %v1825 = vunpack.c.l.b16 %v1773
      %v1826 = vunpack.c.l.b16 %v1774
      %v1827 = vunpack.c.l.b16 %v1775
      %v1828 = vpack.c.b16 %v1813, %v1812
      %v1829 = vpack.c.b16 %v1815, %v1814
      %v1830 = vpack.c.b16 %v1817, %v1816
      %v1831 = vpack.c.b16 %v1819, %v1818
      %v1832 = vpack.c.b16 %v1821, %v1820
      %v1833 = vpack.c.b16 %v1823, %v1822
      %v1834 = vpack.c.b16 %v1825, %v1824
      %v1835 = vpack.c.b16 %v1827, %v1826
      %1844 = vmatprep.subr.bf16.mxu0 0
      %1845 = vmatpush1.bf16.msra.mxu0 %v1835
      %1846 = vmatprep.subr.bf16.mxu0 0
      %1847 = vmatpush1.bf16.msra.mxu0 %v1834
      %1848 = vmatprep.subr.bf16.mxu0 0
      %1849 = vmatpush1.bf16.msra.mxu0 %v1833
      %1850 = vmatprep.subr.bf16.mxu0 0
      %1851 = vmatpush1.bf16.msra.mxu0 %v1832
      %1852 = vmatprep.subr.bf16.mxu0 0
      %1853 = vmatpush1.bf16.msra.mxu0 %v1831
      %1854 = vmatprep.subr.bf16.mxu0 0
      %1855 = vmatpush1.bf16.msra.mxu0 %v1830
      %1856 = vmatprep.subr.bf16.mxu0 0
      %1857 = vmatpush1.bf16.msra.mxu0 %v1829
      %1858 = vmatprep.subr.bf16.mxu0 0
      %1859 = vmatpush1.bf16.msra.mxu0 %v1828
      %1860 = vmatprep.subr.bf16.mxu0 0
      %1861 = vmatpush2.bf16.msra.mxu0 0
      %1862 = vmatprep.subr.bf16.mxu0 0
      %1863 = vmatpush2.bf16.msra.mxu0 0
      %1864 = vmatprep.subr.bf16.mxu0 0
      %1865 = vmatpush2.bf16.msra.mxu0 0
      %1866 = vmatprep.subr.bf16.mxu0 0
      %1867 = vmatpush2.bf16.msra.mxu0 0
      %1868 = vmatprep.subr.bf16.mxu0 0
      %1869 = vmatpush2.bf16.msra.mxu0 0
      %1870 = vmatprep.subr.bf16.mxu0 0
      %1871 = vmatpush2.bf16.msra.mxu0 0
      %1872 = vmatprep.subr.bf16.mxu0 0
      %1873 = vmatpush2.bf16.msra.mxu0 0
      %1874 = vmatprep.subr.bf16.mxu0 0
      %1875 = vmatpush2.bf16.msra.mxu0 0
      %1876 = vmatprep.mubr.bf16.mxu0 0
      %1877 = vmatmul.mubr.bf16.gmra.mxu0 %v1782
      %v1878 = vpop.f32.mrf.mxu0
      %v1879 = vadd.f32 0.0, %v1878
      %v1880 = vpop.f32.mrf.mxu0
      %v1881 = vpop.f32.mrf.mxu0
      %v1882 = vadd.f32 0.0, %v1881
      %v1883 = vpop.f32.mrf.mxu0
      %1884 = vmatprep.mubr.bf16.mxu0 0
      %1885 = vmatmul.mubr.bf16.gmra.mxu0 %v1784
      %v1886 = vpop.f32.mrf.mxu0
      %v1887 = vadd.f32 0.0, %v1886
      %v1888 = vpop.f32.mrf.mxu0
      %v1889 = vpop.f32.mrf.mxu0
      %v1890 = vadd.f32 0.0, %v1889
      %v1891 = vpop.f32.mrf.mxu0
      %1892 = vmatprep.mubr.bf16.mxu0 0
      %1893 = vmatmul.mubr.bf16.gmra.mxu0 %v1786
      %v1894 = vpop.f32.mrf.mxu0
      %v1895 = vadd.f32 0.0, %v1894
      %v1896 = vpop.f32.mrf.mxu0
      %v1897 = vpop.f32.mrf.mxu0
      %v1898 = vadd.f32 0.0, %v1897
      %v1899 = vpop.f32.mrf.mxu0
      %1900 = vmatprep.mubr.bf16.mxu0 0
      %1901 = vmatmul.mubr.bf16.gmra.mxu0 %v1788
      %v1902 = vpop.f32.mrf.mxu0
      %v1903 = vadd.f32 0.0, %v1902
      %v1904 = vpop.f32.mrf.mxu0
      %v1905 = vpop.f32.mrf.mxu0
      %v1906 = vadd.f32 0.0, %v1905
      %v1907 = vpop.f32.mrf.mxu0
      %1908 = vmatprep.mubr.bf16.mxu0 0
      %1909 = vmatmul.mubr.bf16.gmra.mxu0 %v1790
      %v1910 = vpop.f32.mrf.mxu0
      %v1911 = vadd.f32 0.0, %v1910
      %v1912 = vpop.f32.mrf.mxu0
      %v1913 = vpop.f32.mrf.mxu0
      %v1914 = vadd.f32 0.0, %v1913
      %v1915 = vpop.f32.mrf.mxu0
      %1916 = vdwg.mxu0
      %v1917 = vadd.f32 %v1748, %v1879
      %v1918 = vadd.f32 %v1749, %v1882
      %v1919 = vadd.f32 %v1750, %v1887
      %v1920 = vadd.f32 %v1751, %v1890
      %v1921 = vadd.f32 %v1752, %v1895
      %v1922 = vadd.f32 %v1753, %v1898
      %v1923 = vadd.f32 %v1754, %v1903
      %v1924 = vadd.f32 %v1755, %v1906
      %v1925 = vadd.f32 %v1756, %v1911
      %v1926 = vadd.f32 %v1757, %v1914
      %v1927 = vld [vmem:[%s213] sm:$0x1]
      %v1929 = vlaneseq
      %v1930 = vshrl.u32 %v1929, 7
      %v1931 = vsub.s32 0, %v1930
      %v1932 = vrot.slane %v1927, %v1931
      %v1934 = vadd.f32 %v1917, %v1932
      %v1935 = vadd.f32 %v1918, %v1932
      %v1936 = vadd.f32 %v1919, %v1932
      %v1937 = vadd.f32 %v1920, %v1932
      %v1938 = vadd.f32 %v1921, %v1932
      %v1939 = vadd.f32 %v1922, %v1932
      %v1940 = vadd.f32 %v1923, %v1932
      %v1941 = vadd.f32 %v1924, %v1932
      %v1942 = vadd.f32 %v1925, %v1932
      %v1943 = vadd.f32 %v1926, %v1932
      %v1944 = vmax.f32 %v1934, 0.0
      %v1945 = vmax.f32 %v1935, 0.0
      %v1946 = vmax.f32 %v1936, 0.0
      %v1947 = vmax.f32 %v1937, 0.0
      %v1948 = vmax.f32 %v1938, 0.0
      %v1949 = vmax.f32 %v1939, 0.0
      %v1950 = vmax.f32 %v1940, 0.0
      %v1951 = vmax.f32 %v1941, 0.0
      %v1952 = vmax.f32 %v1942, 0.0
      %v1953 = vmax.f32 %v1943, 0.0
      %v1954 = vpack.c.bf16 %v1945, %v1944
      %v1955 = vpack.c.bf16 %v1947, %v1946
      %v1956 = vpack.c.bf16 %v1949, %v1948
      %v1957 = vpack.c.bf16 %v1951, %v1950
      %v1958 = vpack.c.bf16 %v1953, %v1952
      %v1964 = vunpack.c.l.b16 %v1954
      %v1965 = vunpack.c.h.b16 %v1954
      %v1966 = vunpack.c.l.b16 %v1955
      %v1967 = vunpack.c.h.b16 %v1955
      %v1968 = vunpack.c.l.b16 %v1956
      %v1969 = vunpack.c.h.b16 %v1956
      %v1970 = vunpack.c.l.b16 %v1957
      %v1971 = vunpack.c.h.b16 %v1957
      %v1972 = vunpack.c.l.b16 %v1958
      %v1973 = vunpack.c.h.b16 %v1958
      %v1974 = vpack.c.b16 %v1964, %v1964
      %v1975 = vpack.c.b16 %v1965, %v1965
      %v1976 = vpack.c.b16 %v1966, %v1966
      %v1977 = vpack.c.b16 %v1967, %v1967
      %v1978 = vpack.c.b16 %v1968, %v1968
      %v1979 = vpack.c.b16 %v1969, %v1969
      %v1980 = vpack.c.b16 %v1970, %v1970
      %v1981 = vpack.c.b16 %v1971, %v1971
      %v1982 = vpack.c.b16 %v1972, %v1972
      %v1983 = vpack.c.b16 %v1973, %v1973
      %1994 = vst [vmem:[%s221] sm:$0xf] %v1974
      %1995 = vst [vmem:[%s221 + $0x4] sm:$0xf] %v1975
      %1996 = vst [vmem:[%s221 + $0x8] sm:$0xf] %v1976
      %1997 = vst [vmem:[%s221 + $0xc] sm:$0xf] %v1977
      %1998 = vst [vmem:[%s221 + $0x10] sm:$0xf] %v1978
      %1999 = vst [vmem:[%s221 + $0x14] sm:$0xf] %v1979
      %2000 = vst [vmem:[%s221 + $0x18] sm:$0xf] %v1980
      %2001 = vst [vmem:[%s221 + $0x1c] sm:$0xf] %v1981
      %2002 = vst [vmem:[%s221 + $0x20] sm:$0xf] %v1982
      %2003 = vst [vmem:[%s221 + $0x24] sm:$0xf] %v1983
      %p2004 = scmp.lt.s32.totalorder %s18, 1
      %s2005 = scalar_select %p2004, %s18, 1
      %p2006 = scmp.lt.s32.totalorder %s19, 0
      %s2007 = scalar_select %p2006, %s19, 0
      %s2008 = smul.addr %s2005, 10
      %s2009 = sadd.s32 %s2007, %s2008
      %s2010 = smul.addr %s2009, 4
      %s2011 = scalar_lea.vmem %s3, %s2010
      // Predicated region
      $region33: #{bottleneck_forward.4} parent=31 // pred_check
        %p2012 = pneg %p124
      $region34: #{bottleneck_forward.4} parent=31 // pred_check_branch
        %2014 = sbr.rel (%p2012) target = $region36
      $region35: #{bottleneck_forward.4} parent=31 // pred_region
        _
      $region36: #{bottleneck_forward.4} parent=31 // pred_fallthru
        _
    $region32: #{bottleneck_forward.4} parent=5 // pred_fallthru
      _
    %p2015 = scmp.le.s32.totalorder 2, %s9
    // Predicated region
    $region37: #{bottleneck_forward.4} parent=5 // pred_check
      %p2016 = pneg %p2015
    $region38: #{bottleneck_forward.4} parent=5 // pred_check_branch
      %2018 = sbr.rel (%p2016) target = $region40
    $region39: #{bottleneck_forward.4} parent=5 // pred_region
      %s2019 = ssub.s32 %s9, 2
      // Predicated region
      $region41: #{bottleneck_forward.4} parent=39 // pred_check
        %p2020 = pneg %p130
      $region42: #{bottleneck_forward.4} parent=39 // pred_check_branch
        %2022 = sbr.rel (%p2020) target = $region44
      $region43: #{bottleneck_forward.4} parent=39 // pred_region
        %p2023 = scmp.lt.s32.totalorder %s20, 1
        %s2024 = scalar_select %p2023, %s20, 1
        %p2025 = scmp.lt.s32.totalorder %s21, 0
        %s2026 = scalar_select %p2025, %s21, 0
        %s2027 = smul.addr %s2024, 10
        %s2028 = sadd.s32 %s2026, %s2027
        %s2029 = smul.addr %s2028, 4
        %s2030 = scalar_lea.vmem %s3, %s2029
      $region44: #{bottleneck_forward.4} parent=39 // pred_fallthru
        _
    $region40: #{bottleneck_forward.4} parent=5 // pred_fallthru
      _
  $region6: #{bottleneck_forward.4} parent=0 // loop_footer
    %s13 = sadd.s32 1, %s9
  $region7: #{bottleneck_forward.4} parent=0 // loop_footer_branch
    %8 = sbr.rel target = $region3
  $region8: #{bottleneck_forward.4} parent=0 // loop_exit
    _

</llo_original>
